<compile_context>
chip_gen: v6e
topology: v6e:2x2x1
jax: 0.10.0
libtpu: 0.0.40
codegen_flags: <defaults>
</compile_context>

<pallas_src>
import functools

import jax
import jax.numpy as jnp
from jax import lax
from jax.experimental import pallas as pl
from jax.experimental.pallas import tpu as pltpu

MATMUL_DTYPE = jnp.bfloat16   # MXU operand dtype; accumulation stays f32.
SEQ_DTYPE = jnp.bfloat16      # inter-layer hidden-sequence slab dtype.


def _unroll_window(T, cap=8):
    """Largest divisor of T that is <= cap (bounds vreg pressure at large T)."""
    for d in range(min(T, cap), 0, -1):
        if T % d == 0:
            return d
    return 1


def _make_lstm_kernel(num_layers, B, T, I, H, unroll):
    n_windows = T // unroll

    def kernel(*refs):
        # refs layout:
        #   [0]                  x_tm      (T*B, I)  bf16, time-major flattened
        #   per layer l (3 each) w_ih (in_l,4H) bf16, w_hh (H,4H) bf16, b (1,4H) f32
        #   [1+3L]               h_out     (B, H)   f32  <- last-timestep top-layer h
        #   [2+3L]               gates_ref (T*B, 4H) f32 scratch (hoisted projection)
        #   [3+3L]               seq_ref   (T*B, H)  bf16 scratch (layer output seq)
        x_ref = refs[0]
        idx = 1
        layer_refs = []
        for _ in range(num_layers):
            layer_refs.append((refs[idx], refs[idx + 1], refs[idx + 2]))
            idx += 3
        h_out_ref = refs[idx]
        gates_ref = refs[idx + 1]
        seq_ref = refs[idx + 2]

        h_last = jnp.zeros((B, H), jnp.float32)

        for l, (w_ih_ref, w_hh_ref, b_ref) in enumerate(layer_refs):
            # Hoisted input projection: ONE (T*B, in_l) x (in_l, 4H) MXU matmul
            # with the combined bias folded in; removed from the recurrence.
            inp = x_ref[...] if l == 0 else seq_ref[...]          # bf16
            gates_ref[...] = (
                jnp.dot(inp, w_ih_ref[...], preferred_element_type=jnp.float32)
                + b_ref[...]
            )

            # (H, 4H) bf16 = 2 vregs at H=32 -> keep register-resident.
            # TODO(synk): at H >= 256 index w_hh_ref inside the dot instead
            #   (the hoisted slab would spill around the serial loop).
            w_hh = w_hh_ref[...]
            write_seq = l < num_layers - 1   # last layer's sequence is never read

            def window(w, carry, w_hh=w_hh, write_seq=write_seq):
                """One unroll window of `unroll` timesteps; single seq store."""
                h, c = carry
                h_seq = []
                for u in range(unroll):
                    row = w * (unroll * B) + u * B
                    if not isinstance(row, int):
                        row = pl.multiple_of(row, B)
                    # Only the recurrent matmul stays inside the time loop.
                    g = gates_ref[pl.ds(row, B), :] + jnp.dot(
                        h.astype(MATMUL_DTYPE), w_hh,
                        preferred_element_type=jnp.float32)
                    # One full-width sigmoid (i,f,o gates); tanh only on the
                    # g-gate slice and on c_new.  PyTorch gate order: i,f,g,o.
                    sig = jax.nn.sigmoid(g)
                    i_g = sig[:, 0 * H:1 * H]
                    f_g = sig[:, 1 * H:2 * H]
                    o_g = sig[:, 3 * H:4 * H]
                    g_g = jnp.tanh(g[:, 2 * H:3 * H])
                    c = f_g * c + i_g * g_g
                    h = o_g * jnp.tanh(c)
                    if write_seq:
                        h_seq.append(h.astype(SEQ_DTYPE))
                if write_seq:
                    # Batched writeback: one (unroll*B, H) store per window.
                    base = w * (unroll * B)
                    if not isinstance(base, int):
                        base = pl.multiple_of(base, unroll * B)
                    seq_ref[pl.ds(base, unroll * B), :] = jnp.concatenate(
                        h_seq, axis=0)
                return h, c

            h0 = jnp.zeros((B, H), jnp.float32)
            c0 = jnp.zeros((B, H), jnp.float32)
            if n_windows == 1:
                h_last, _ = window(0, (h0, c0))          # fully unrolled (T <= 8)
            else:
                h_last, _ = lax.fori_loop(0, n_windows, window, (h0, c0))

        h_out_ref[...] = h_last.astype(h_out_ref.dtype)

    return kernel


def lstm_model_forward(x, params, *, num_layers, hidden_size, output_size):
    """x: (batch, seq, features), batch_first like PyTorch. Returns (batch, output_size)."""
    del output_size  # implied by params["w_fc"]
    B, T, I = x.shape
    H = hidden_size
    unroll = _unroll_window(T)

    # Time-major flatten outside the kernel so the batched input projection
    # sees a single contiguous (T*B, in) operand (row r = t*B + b).
    x_tm = jnp.transpose(x, (1, 0, 2)).reshape(T * B, I).astype(MATMUL_DTYPE)

    inputs = [x_tm]
    for l in range(num_layers):
        inputs.append(params[f"w_ih_{l}"])   # (in_l, 4H) bf16 (pre-cast at init)
        inputs.append(params[f"w_hh_{l}"])   # (H, 4H)   bf16
        inputs.append(params[f"b_{l}"])      # (1, 4H)   f32

    # VMEM budget: scratch slabs + weights + I/O with ~25% headroom, floored
    # at 32 MiB and capped below the physical ceiling.
    slab_bytes = T * B * 4 * H * 4 + T * B * H * 2
    param_bytes = sum(int(a.size) * a.dtype.itemsize for a in inputs)
    io_bytes = T * B * I * 2 + B * H * 4
    vmem_limit = int(min(100 * 1024 * 1024,
                         max(32 * 1024 * 1024,
                             1.25 * (slab_bytes + param_bytes + io_bytes))))

    kernel = _make_lstm_kernel(num_layers, B, T, I, H, unroll)
    vmem_spec = pl.BlockSpec(memory_space=pltpu.MemorySpace.VMEM)
    h_last = pl.pallas_call(
        kernel,
        out_shape=jax.ShapeDtypeStruct((B, H), jnp.float32),
        in_specs=[vmem_spec] * len(inputs),
        out_specs=vmem_spec,
        scratch_shapes=[
            pltpu.VMEM((T * B, 4 * H), jnp.float32),  # hoisted input-projection slab
            pltpu.VMEM((T * B, H), SEQ_DTYPE),        # layer output sequence slab
        ],
        compiler_params=pltpu.CompilerParams(vmem_limit_bytes=vmem_limit),
    )(*inputs)

    # FC head in the wrapper: (B,H)x(H,1) is a degenerate MXU shape and a
    # 1-lane masked store inside a kernel; XLA handles it trivially here (f32).
    return h_last @ params["w_fc"] + params["b_fc"]


def init_params(key, input_size, hidden_size, num_layers, output_size):
    """PyTorch-default init U(-1/sqrt(H), 1/sqrt(H)).  LSTM matmul weights are
    pre-cast to bf16 ONCE here (one-time weight cast); biases and FC stay f32."""
    params = {}
    H = hidden_size
    k = 1.0 / jnp.sqrt(jnp.float32(H))
    keys = jax.random.split(key, num_layers * 4 + 2)
    ki = 0
    for l in range(num_layers):
        in_l = input_size if l == 0 else hidden_size
        # PyTorch stores W_ih (4H, in_l), W_hh (4H, H); pre-transpose for x @ W.
        w_ih = jax.random.uniform(keys[ki], (4 * H, in_l), jnp.float32, -k, k); ki += 1
        w_hh = jax.random.uniform(keys[ki], (4 * H, H), jnp.float32, -k, k); ki += 1
        b_ih = jax.random.uniform(keys[ki], (4 * H,), jnp.float32, -k, k); ki += 1
        b_hh = jax.random.uniform(keys[ki], (4 * H,), jnp.float32, -k, k); ki += 1
        params[f"w_ih_{l}"] = w_ih.T.astype(MATMUL_DTYPE)     # (in_l, 4H)
        params[f"w_hh_{l}"] = w_hh.T.astype(MATMUL_DTYPE)     # (H, 4H)
        params[f"b_{l}"] = (b_ih + b_hh).reshape(1, 4 * H)    # (1, 4H) f32
    w_fc = jax.random.uniform(keys[ki], (output_size, H), jnp.float32, -k, k); ki += 1
    b_fc = jax.random.uniform(keys[ki], (output_size,), jnp.float32, -k, k)
    params["w_fc"] = w_fc.T                                   # (H, O) f32
    params["b_fc"] = b_fc.reshape(1, output_size)             # (1, O) f32
    return params


if __name__ == "__main__":
    # (batch, seq, input_size) — batch=8 fills f32 sublanes.
    batch, seq_len = 8, 8
    input_size, hidden_size, num_layers, output_size = 16, 32, 2, 1

    key = jax.random.PRNGKey(0)
    kx, kp = jax.random.split(key)
    x = jax.random.normal(kx, (batch, seq_len, input_size), jnp.float32)
    params = init_params(kp, input_size, hidden_size, num_layers, output_size)

    fwd = jax.jit(
        functools.partial(
            lstm_model_forward,
            num_layers=num_layers,
            hidden_size=hidden_size,
            output_size=output_size,
        )
    )
    out = fwd(x, params)
    jax.block_until_ready(out)
    assert out.shape == (batch, output_size), out.shape
    print("KERNEL_OK")
</pallas_src>

<mosaic_0001>
module attributes {stable_mosaic.version = 11 : i64} {
  func.func @kernel(%arg0: memref<64x16xbf16, #tpu.memory_space<vmem>>, %arg1: memref<16x128xbf16, #tpu.memory_space<vmem>>, %arg2: memref<32x128xbf16, #tpu.memory_space<vmem>>, %arg3: memref<1x128xf32, #tpu.memory_space<vmem>>, %arg4: memref<32x128xbf16, #tpu.memory_space<vmem>>, %arg5: memref<32x128xbf16, #tpu.memory_space<vmem>>, %arg6: memref<1x128xf32, #tpu.memory_space<vmem>>, %arg7: memref<8x32xf32, #tpu.memory_space<vmem>>, %arg8: memref<64x128xf32, #tpu.memory_space<vmem>>, %arg9: memref<64x32xbf16, #tpu.memory_space<vmem>>) attributes {dimension_semantics = [], scalar_prefetch = 0 : i64, scratch_operands = 2 : i64, tpu.core_type = #tpu.core_type<tc>} {
    %c0 = arith.constant 0 : index
    %c0_0 = arith.constant 0 : index
    %0 = vector.load %arg0[%c0, %c0_0] : memref<64x16xbf16, #tpu.memory_space<vmem>>, vector<64x16xbf16>
    %c0_1 = arith.constant 0 : index
    %c0_2 = arith.constant 0 : index
    %1 = vector.load %arg1[%c0_1, %c0_2] : memref<16x128xbf16, #tpu.memory_space<vmem>>, vector<16x128xbf16>
    %cst = arith.constant dense<0.000000e+00> : vector<64x128xf32>
    %2 = tpu.matmul %0, %1, %cst {dimension_numbers = #tpu.dot_dimension_numbers<[1], [0], [0], [1], [0, 0, 1, 1], [], []>} : vector<64x16xbf16>, vector<16x128xbf16>, vector<64x128xf32> -> vector<64x128xf32>
    %c0_3 = arith.constant 0 : index
    %c0_4 = arith.constant 0 : index
    %3 = vector.load %arg3[%c0_3, %c0_4] : memref<1x128xf32, #tpu.memory_space<vmem>>, vector<1x128xf32>
    %4 = vector.broadcast %3 : vector<1x128xf32> to vector<64x128xf32>
    %5 = arith.addf %2, %4 : vector<64x128xf32>
    %c0_5 = arith.constant 0 : index
    %c0_6 = arith.constant 0 : index
    %6 = vector.load %arg8[%c0_5, %c0_6] : memref<64x128xf32, #tpu.memory_space<vmem>>, vector<64x128xf32>
    tpu.vector_store %arg8[%c0_5, %c0_6], %5 {strides = array<i32>} : memref<64x128xf32, #tpu.memory_space<vmem>>, vector<64x128xf32>,
    %c0_7 = arith.constant 0 : index
    %c0_8 = arith.constant 0 : index
    %7 = vector.load %arg2[%c0_7, %c0_8] : memref<32x128xbf16, #tpu.memory_space<vmem>>, vector<32x128xbf16>
    %cst_9 = arith.constant 0.000000e+00 : f32
    %8 = vector.broadcast %cst_9 : f32 to vector<8x32xf32>
    %cst_10 = arith.constant 0.000000e+00 : f32
    %9 = vector.broadcast %cst_10 : f32 to vector<8x32xf32>
    %c0_11 = arith.constant 0 : index
    %c0_12 = arith.constant 0 : index
    %10 = vector.load %arg8[%c0_11, %c0_12] : memref<64x128xf32, #tpu.memory_space<vmem>>, vector<8x128xf32>
    %11 = arith.truncf %8 : vector<8x32xf32> to vector<8x32xbf16>
    %cst_13 = arith.constant dense<0.000000e+00> : vector<8x128xf32>
    %12 = tpu.matmul %11, %7, %cst_13 {dimension_numbers = #tpu.dot_dimension_numbers<[1], [0], [0], [1], [0, 0, 1, 1], [], []>} : vector<8x32xbf16>, vector<32x128xbf16>, vector<8x128xf32> -> vector<8x128xf32>
    %13 = arith.addf %10, %12 : vector<8x128xf32>
    %14 = arith.negf %13 : vector<8x128xf32>
    %15 = math.exp %14 : vector<8x128xf32>
    %cst_14 = arith.constant 1.000000e+00 : f32
    %16 = vector.broadcast %cst_14 : f32 to vector<8x128xf32>
    %17 = arith.addf %16, %15 : vector<8x128xf32>
    %18 = arith.divf %16, %17 : vector<8x128xf32>
    %19 = vector.extract_strided_slice %18 {offsets = [0, 0], sizes = [8, 32], strides = [1, 1]} : vector<8x128xf32> to vector<8x32xf32>
    %20 = vector.extract_strided_slice %18 {offsets = [0, 32], sizes = [8, 32], strides = [1, 1]} : vector<8x128xf32> to vector<8x32xf32>
    %21 = vector.extract_strided_slice %18 {offsets = [0, 96], sizes = [8, 32], strides = [1, 1]} : vector<8x128xf32> to vector<8x32xf32>
    %22 = vector.extract_strided_slice %13 {offsets = [0, 64], sizes = [8, 32], strides = [1, 1]} : vector<8x128xf32> to vector<8x32xf32>
    %23 = math.tanh %22 : vector<8x32xf32>
    %24 = arith.mulf %20, %9 : vector<8x32xf32>
    %25 = arith.mulf %19, %23 : vector<8x32xf32>
    %26 = arith.addf %24, %25 : vector<8x32xf32>
    %27 = math.tanh %26 : vector<8x32xf32>
    %28 = arith.mulf %21, %27 : vector<8x32xf32>
    %29 = arith.truncf %28 : vector<8x32xf32> to vector<8x32xbf16>
    %c8 = arith.constant 8 : index
    %c0_15 = arith.constant 0 : index
    %30 = vector.load %arg8[%c8, %c0_15] : memref<64x128xf32, #tpu.memory_space<vmem>>, vector<8x128xf32>
    %31 = arith.truncf %28 : vector<8x32xf32> to vector<8x32xbf16>
    %cst_16 = arith.constant dense<0.000000e+00> : vector<8x128xf32>
    %32 = tpu.matmul %31, %7, %cst_16 {dimension_numbers = #tpu.dot_dimension_numbers<[1], [0], [0], [1], [0, 0, 1, 1], [], []>} : vector<8x32xbf16>, vector<32x128xbf16>, vector<8x128xf32> -> vector<8x128xf32>
    %33 = arith.addf %30, %32 : vector<8x128xf32>
    %34 = arith.negf %33 : vector<8x128xf32>
    %35 = math.exp %34 : vector<8x128xf32>
    %cst_17 = arith.constant 1.000000e+00 : f32
    %36 = vector.broadcast %cst_17 : f32 to vector<8x128xf32>
    %37 = arith.addf %36, %35 : vector<8x128xf32>
    %38 = arith.divf %36, %37 : vector<8x128xf32>
    %39 = vector.extract_strided_slice %38 {offsets = [0, 0], sizes = [8, 32], strides = [1, 1]} : vector<8x128xf32> to vector<8x32xf32>
    %40 = vector.extract_strided_slice %38 {offsets = [0, 32], sizes = [8, 32], strides = [1, 1]} : vector<8x128xf32> to vector<8x32xf32>
    %41 = vector.extract_strided_slice %38 {offsets = [0, 96], sizes = [8, 32], strides = [1, 1]} : vector<8x128xf32> to vector<8x32xf32>
    %42 = vector.extract_strided_slice %33 {offsets = [0, 64], sizes = [8, 32], strides = [1, 1]} : vector<8x128xf32> to vector<8x32xf32>
    %43 = math.tanh %42 : vector<8x32xf32>
    %44 = arith.mulf %40, %26 : vector<8x32xf32>
    %45 = arith.mulf %39, %43 : vector<8x32xf32>
    %46 = arith.addf %44, %45 : vector<8x32xf32>
    %47 = math.tanh %46 : vector<8x32xf32>
    %48 = arith.mulf %41, %47 : vector<8x32xf32>
    %49 = arith.truncf %48 : vector<8x32xf32> to vector<8x32xbf16>
    %c16 = arith.constant 16 : index
    %c0_18 = arith.constant 0 : index
    %50 = vector.load %arg8[%c16, %c0_18] : memref<64x128xf32, #tpu.memory_space<vmem>>, vector<8x128xf32>
    %51 = arith.truncf %48 : vector<8x32xf32> to vector<8x32xbf16>
    %cst_19 = arith.constant dense<0.000000e+00> : vector<8x128xf32>
    %52 = tpu.matmul %51, %7, %cst_19 {dimension_numbers = #tpu.dot_dimension_numbers<[1], [0], [0], [1], [0, 0, 1, 1], [], []>} : vector<8x32xbf16>, vector<32x128xbf16>, vector<8x128xf32> -> vector<8x128xf32>
    %53 = arith.addf %50, %52 : vector<8x128xf32>
    %54 = arith.negf %53 : vector<8x128xf32>
    %55 = math.exp %54 : vector<8x128xf32>
    %cst_20 = arith.constant 1.000000e+00 : f32
    %56 = vector.broadcast %cst_20 : f32 to vector<8x128xf32>
    %57 = arith.addf %56, %55 : vector<8x128xf32>
    %58 = arith.divf %56, %57 : vector<8x128xf32>
    %59 = vector.extract_strided_slice %58 {offsets = [0, 0], sizes = [8, 32], strides = [1, 1]} : vector<8x128xf32> to vector<8x32xf32>
    %60 = vector.extract_strided_slice %58 {offsets = [0, 32], sizes = [8, 32], strides = [1, 1]} : vector<8x128xf32> to vector<8x32xf32>
    %61 = vector.extract_strided_slice %58 {offsets = [0, 96], sizes = [8, 32], strides = [1, 1]} : vector<8x128xf32> to vector<8x32xf32>
    %62 = vector.extract_strided_slice %53 {offsets = [0, 64], sizes = [8, 32], strides = [1, 1]} : vector<8x128xf32> to vector<8x32xf32>
    %63 = math.tanh %62 : vector<8x32xf32>
    %64 = arith.mulf %60, %46 : vector<8x32xf32>
    %65 = arith.mulf %59, %63 : vector<8x32xf32>
    %66 = arith.addf %64, %65 : vector<8x32xf32>
    %67 = math.tanh %66 : vector<8x32xf32>
    %68 = arith.mulf %61, %67 : vector<8x32xf32>
    %69 = arith.truncf %68 : vector<8x32xf32> to vector<8x32xbf16>
    %c24 = arith.constant 24 : index
    %c0_21 = arith.constant 0 : index
    %70 = vector.load %arg8[%c24, %c0_21] : memref<64x128xf32, #tpu.memory_space<vmem>>, vector<8x128xf32>
    %71 = arith.truncf %68 : vector<8x32xf32> to vector<8x32xbf16>
    %cst_22 = arith.constant dense<0.000000e+00> : vector<8x128xf32>
    %72 = tpu.matmul %71, %7, %cst_22 {dimension_numbers = #tpu.dot_dimension_numbers<[1], [0], [0], [1], [0, 0, 1, 1], [], []>} : vector<8x32xbf16>, vector<32x128xbf16>, vector<8x128xf32> -> vector<8x128xf32>
    %73 = arith.addf %70, %72 : vector<8x128xf32>
    %74 = arith.negf %73 : vector<8x128xf32>
    %75 = math.exp %74 : vector<8x128xf32>
    %cst_23 = arith.constant 1.000000e+00 : f32
    %76 = vector.broadcast %cst_23 : f32 to vector<8x128xf32>
    %77 = arith.addf %76, %75 : vector<8x128xf32>
    %78 = arith.divf %76, %77 : vector<8x128xf32>
    %79 = vector.extract_strided_slice %78 {offsets = [0, 0], sizes = [8, 32], strides = [1, 1]} : vector<8x128xf32> to vector<8x32xf32>
    %80 = vector.extract_strided_slice %78 {offsets = [0, 32], sizes = [8, 32], strides = [1, 1]} : vector<8x128xf32> to vector<8x32xf32>
    %81 = vector.extract_strided_slice %78 {offsets = [0, 96], sizes = [8, 32], strides = [1, 1]} : vector<8x128xf32> to vector<8x32xf32>
    %82 = vector.extract_strided_slice %73 {offsets = [0, 64], sizes = [8, 32], strides = [1, 1]} : vector<8x128xf32> to vector<8x32xf32>
    %83 = math.tanh %82 : vector<8x32xf32>
    %84 = arith.mulf %80, %66 : vector<8x32xf32>
    %85 = arith.mulf %79, %83 : vector<8x32xf32>
    %86 = arith.addf %84, %85 : vector<8x32xf32>
    %87 = math.tanh %86 : vector<8x32xf32>
    %88 = arith.mulf %81, %87 : vector<8x32xf32>
    %89 = arith.truncf %88 : vector<8x32xf32> to vector<8x32xbf16>
    %c32 = arith.constant 32 : index
    %c0_24 = arith.constant 0 : index
    %90 = vector.load %arg8[%c32, %c0_24] : memref<64x128xf32, #tpu.memory_space<vmem>>, vector<8x128xf32>
    %91 = arith.truncf %88 : vector<8x32xf32> to vector<8x32xbf16>
    %cst_25 = arith.constant dense<0.000000e+00> : vector<8x128xf32>
    %92 = tpu.matmul %91, %7, %cst_25 {dimension_numbers = #tpu.dot_dimension_numbers<[1], [0], [0], [1], [0, 0, 1, 1], [], []>} : vector<8x32xbf16>, vector<32x128xbf16>, vector<8x128xf32> -> vector<8x128xf32>
    %93 = arith.addf %90, %92 : vector<8x128xf32>
    %94 = arith.negf %93 : vector<8x128xf32>
    %95 = math.exp %94 : vector<8x128xf32>
    %cst_26 = arith.constant 1.000000e+00 : f32
    %96 = vector.broadcast %cst_26 : f32 to vector<8x128xf32>
    %97 = arith.addf %96, %95 : vector<8x128xf32>
    %98 = arith.divf %96, %97 : vector<8x128xf32>
    %99 = vector.extract_strided_slice %98 {offsets = [0, 0], sizes = [8, 32], strides = [1, 1]} : vector<8x128xf32> to vector<8x32xf32>
    %100 = vector.extract_strided_slice %98 {offsets = [0, 32], sizes = [8, 32], strides = [1, 1]} : vector<8x128xf32> to vector<8x32xf32>
    %101 = vector.extract_strided_slice %98 {offsets = [0, 96], sizes = [8, 32], strides = [1, 1]} : vector<8x128xf32> to vector<8x32xf32>
    %102 = vector.extract_strided_slice %93 {offsets = [0, 64], sizes = [8, 32], strides = [1, 1]} : vector<8x128xf32> to vector<8x32xf32>
    %103 = math.tanh %102 : vector<8x32xf32>
    %104 = arith.mulf %100, %86 : vector<8x32xf32>
    %105 = arith.mulf %99, %103 : vector<8x32xf32>
    %106 = arith.addf %104, %105 : vector<8x32xf32>
    %107 = math.tanh %106 : vector<8x32xf32>
    %108 = arith.mulf %101, %107 : vector<8x32xf32>
    %109 = arith.truncf %108 : vector<8x32xf32> to vector<8x32xbf16>
    %c40 = arith.constant 40 : index
    %c0_27 = arith.constant 0 : index
    %110 = vector.load %arg8[%c40, %c0_27] : memref<64x128xf32, #tpu.memory_space<vmem>>, vector<8x128xf32>
    %111 = arith.truncf %108 : vector<8x32xf32> to vector<8x32xbf16>
    %cst_28 = arith.constant dense<0.000000e+00> : vector<8x128xf32>
    %112 = tpu.matmul %111, %7, %cst_28 {dimension_numbers = #tpu.dot_dimension_numbers<[1], [0], [0], [1], [0, 0, 1, 1], [], []>} : vector<8x32xbf16>, vector<32x128xbf16>, vector<8x128xf32> -> vector<8x128xf32>
    %113 = arith.addf %110, %112 : vector<8x128xf32>
    %114 = arith.negf %113 : vector<8x128xf32>
    %115 = math.exp %114 : vector<8x128xf32>
    %cst_29 = arith.constant 1.000000e+00 : f32
    %116 = vector.broadcast %cst_29 : f32 to vector<8x128xf32>
    %117 = arith.addf %116, %115 : vector<8x128xf32>
    %118 = arith.divf %116, %117 : vector<8x128xf32>
    %119 = vector.extract_strided_slice %118 {offsets = [0, 0], sizes = [8, 32], strides = [1, 1]} : vector<8x128xf32> to vector<8x32xf32>
    %120 = vector.extract_strided_slice %118 {offsets = [0, 32], sizes = [8, 32], strides = [1, 1]} : vector<8x128xf32> to vector<8x32xf32>
    %121 = vector.extract_strided_slice %118 {offsets = [0, 96], sizes = [8, 32], strides = [1, 1]} : vector<8x128xf32> to vector<8x32xf32>
    %122 = vector.extract_strided_slice %113 {offsets = [0, 64], sizes = [8, 32], strides = [1, 1]} : vector<8x128xf32> to vector<8x32xf32>
    %123 = math.tanh %122 : vector<8x32xf32>
    %124 = arith.mulf %120, %106 : vector<8x32xf32>
    %125 = arith.mulf %119, %123 : vector<8x32xf32>
    %126 = arith.addf %124, %125 : vector<8x32xf32>
    %127 = math.tanh %126 : vector<8x32xf32>
    %128 = arith.mulf %121, %127 : vector<8x32xf32>
    %129 = arith.truncf %128 : vector<8x32xf32> to vector<8x32xbf16>
    %c48 = arith.constant 48 : index
    %c0_30 = arith.constant 0 : index
    %130 = vector.load %arg8[%c48, %c0_30] : memref<64x128xf32, #tpu.memory_space<vmem>>, vector<8x128xf32>
    %131 = arith.truncf %128 : vector<8x32xf32> to vector<8x32xbf16>
    %cst_31 = arith.constant dense<0.000000e+00> : vector<8x128xf32>
    %132 = tpu.matmul %131, %7, %cst_31 {dimension_numbers = #tpu.dot_dimension_numbers<[1], [0], [0], [1], [0, 0, 1, 1], [], []>} : vector<8x32xbf16>, vector<32x128xbf16>, vector<8x128xf32> -> vector<8x128xf32>
    %133 = arith.addf %130, %132 : vector<8x128xf32>
    %134 = arith.negf %133 : vector<8x128xf32>
    %135 = math.exp %134 : vector<8x128xf32>
    %cst_32 = arith.constant 1.000000e+00 : f32
    %136 = vector.broadcast %cst_32 : f32 to vector<8x128xf32>
    %137 = arith.addf %136, %135 : vector<8x128xf32>
    %138 = arith.divf %136, %137 : vector<8x128xf32>
    %139 = vector.extract_strided_slice %138 {offsets = [0, 0], sizes = [8, 32], strides = [1, 1]} : vector<8x128xf32> to vector<8x32xf32>
    %140 = vector.extract_strided_slice %138 {offsets = [0, 32], sizes = [8, 32], strides = [1, 1]} : vector<8x128xf32> to vector<8x32xf32>
    %141 = vector.extract_strided_slice %138 {offsets = [0, 96], sizes = [8, 32], strides = [1, 1]} : vector<8x128xf32> to vector<8x32xf32>
    %142 = vector.extract_strided_slice %133 {offsets = [0, 64], sizes = [8, 32], strides = [1, 1]} : vector<8x128xf32> to vector<8x32xf32>
    %143 = math.tanh %142 : vector<8x32xf32>
    %144 = arith.mulf %140, %126 : vector<8x32xf32>
    %145 = arith.mulf %139, %143 : vector<8x32xf32>
    %146 = arith.addf %144, %145 : vector<8x32xf32>
    %147 = math.tanh %146 : vector<8x32xf32>
    %148 = arith.mulf %141, %147 : vector<8x32xf32>
    %149 = arith.truncf %148 : vector<8x32xf32> to vector<8x32xbf16>
    %c56 = arith.constant 56 : index
    %c0_33 = arith.constant 0 : index
    %150 = vector.load %arg8[%c56, %c0_33] : memref<64x128xf32, #tpu.memory_space<vmem>>, vector<8x128xf32>
    %151 = arith.truncf %148 : vector<8x32xf32> to vector<8x32xbf16>
    %cst_34 = arith.constant dense<0.000000e+00> : vector<8x128xf32>
    %152 = tpu.matmul %151, %7, %cst_34 {dimension_numbers = #tpu.dot_dimension_numbers<[1], [0], [0], [1], [0, 0, 1, 1], [], []>} : vector<8x32xbf16>, vector<32x128xbf16>, vector<8x128xf32> -> vector<8x128xf32>
    %153 = arith.addf %150, %152 : vector<8x128xf32>
    %154 = arith.negf %153 : vector<8x128xf32>
    %155 = math.exp %154 : vector<8x128xf32>
    %cst_35 = arith.constant 1.000000e+00 : f32
    %156 = vector.broadcast %cst_35 : f32 to vector<8x128xf32>
    %157 = arith.addf %156, %155 : vector<8x128xf32>
    %158 = arith.divf %156, %157 : vector<8x128xf32>
    %159 = vector.extract_strided_slice %158 {offsets = [0, 0], sizes = [8, 32], strides = [1, 1]} : vector<8x128xf32> to vector<8x32xf32>
    %160 = vector.extract_strided_slice %158 {offsets = [0, 32], sizes = [8, 32], strides = [1, 1]} : vector<8x128xf32> to vector<8x32xf32>
    %161 = vector.extract_strided_slice %158 {offsets = [0, 96], sizes = [8, 32], strides = [1, 1]} : vector<8x128xf32> to vector<8x32xf32>
    %162 = vector.extract_strided_slice %153 {offsets = [0, 64], sizes = [8, 32], strides = [1, 1]} : vector<8x128xf32> to vector<8x32xf32>
    %163 = math.tanh %162 : vector<8x32xf32>
    %164 = arith.mulf %160, %146 : vector<8x32xf32>
    %165 = arith.mulf %159, %163 : vector<8x32xf32>
    %166 = arith.addf %164, %165 : vector<8x32xf32>
    %167 = math.tanh %166 : vector<8x32xf32>
    %168 = arith.mulf %161, %167 : vector<8x32xf32>
    %169 = arith.truncf %168 : vector<8x32xf32> to vector<8x32xbf16>
    %170 = tpu.concatenate %29, %49, %69, %89, %109, %129, %149, %169 in 0 : vector<8x32xbf16>, vector<8x32xbf16>, vector<8x32xbf16>, vector<8x32xbf16>, vector<8x32xbf16>, vector<8x32xbf16>, vector<8x32xbf16>, vector<8x32xbf16> -> vector<64x32xbf16>
    %c0_36 = arith.constant 0 : index
    %c0_37 = arith.constant 0 : index
    %171 = vector.load %arg9[%c0_36, %c0_37] : memref<64x32xbf16, #tpu.memory_space<vmem>>, vector<64x32xbf16>
    tpu.vector_store %arg9[%c0_36, %c0_37], %170 {strides = array<i32>} : memref<64x32xbf16, #tpu.memory_space<vmem>>, vector<64x32xbf16>,
    %c0_38 = arith.constant 0 : index
    %c0_39 = arith.constant 0 : index
    %172 = vector.load %arg9[%c0_38, %c0_39] : memref<64x32xbf16, #tpu.memory_space<vmem>>, vector<64x32xbf16>
    %c0_40 = arith.constant 0 : index
    %c0_41 = arith.constant 0 : index
    %173 = vector.load %arg4[%c0_40, %c0_41] : memref<32x128xbf16, #tpu.memory_space<vmem>>, vector<32x128xbf16>
    %cst_42 = arith.constant dense<0.000000e+00> : vector<64x128xf32>
    %174 = tpu.matmul %172, %173, %cst_42 {dimension_numbers = #tpu.dot_dimension_numbers<[1], [0], [0], [1], [0, 0, 1, 1], [], []>} : vector<64x32xbf16>, vector<32x128xbf16>, vector<64x128xf32> -> vector<64x128xf32>
    %c0_43 = arith.constant 0 : index
    %c0_44 = arith.constant 0 : index
    %175 = vector.load %arg6[%c0_43, %c0_44] : memref<1x128xf32, #tpu.memory_space<vmem>>, vector<1x128xf32>
    %176 = vector.broadcast %175 : vector<1x128xf32> to vector<64x128xf32>
    %177 = arith.addf %174, %176 : vector<64x128xf32>
    %c0_45 = arith.constant 0 : index
    %c0_46 = arith.constant 0 : index
    %178 = vector.load %arg8[%c0_45, %c0_46] : memref<64x128xf32, #tpu.memory_space<vmem>>, vector<64x128xf32>
    tpu.vector_store %arg8[%c0_45, %c0_46], %177 {strides = array<i32>} : memref<64x128xf32, #tpu.memory_space<vmem>>, vector<64x128xf32>,
    %c0_47 = arith.constant 0 : index
    %c0_48 = arith.constant 0 : index
    %179 = vector.load %arg5[%c0_47, %c0_48] : memref<32x128xbf16, #tpu.memory_space<vmem>>, vector<32x128xbf16>
    %cst_49 = arith.constant 0.000000e+00 : f32
    %180 = vector.broadcast %cst_49 : f32 to vector<8x32xf32>
    %cst_50 = arith.constant 0.000000e+00 : f32
    %181 = vector.broadcast %cst_50 : f32 to vector<8x32xf32>
    %c0_51 = arith.constant 0 : index
    %c0_52 = arith.constant 0 : index
    %182 = vector.load %arg8[%c0_51, %c0_52] : memref<64x128xf32, #tpu.memory_space<vmem>>, vector<8x128xf32>
    %183 = arith.truncf %180 : vector<8x32xf32> to vector<8x32xbf16>
    %cst_53 = arith.constant dense<0.000000e+00> : vector<8x128xf32>
    %184 = tpu.matmul %183, %179, %cst_53 {dimension_numbers = #tpu.dot_dimension_numbers<[1], [0], [0], [1], [0, 0, 1, 1], [], []>} : vector<8x32xbf16>, vector<32x128xbf16>, vector<8x128xf32> -> vector<8x128xf32>
    %185 = arith.addf %182, %184 : vector<8x128xf32>
    %186 = arith.negf %185 : vector<8x128xf32>
    %187 = math.exp %186 : vector<8x128xf32>
    %cst_54 = arith.constant 1.000000e+00 : f32
    %188 = vector.broadcast %cst_54 : f32 to vector<8x128xf32>
    %189 = arith.addf %188, %187 : vector<8x128xf32>
    %190 = arith.divf %188, %189 : vector<8x128xf32>
    %191 = vector.extract_strided_slice %190 {offsets = [0, 0], sizes = [8, 32], strides = [1, 1]} : vector<8x128xf32> to vector<8x32xf32>
    %192 = vector.extract_strided_slice %190 {offsets = [0, 32], sizes = [8, 32], strides = [1, 1]} : vector<8x128xf32> to vector<8x32xf32>
    %193 = vector.extract_strided_slice %190 {offsets = [0, 96], sizes = [8, 32], strides = [1, 1]} : vector<8x128xf32> to vector<8x32xf32>
    %194 = vector.extract_strided_slice %185 {offsets = [0, 64], sizes = [8, 32], strides = [1, 1]} : vector<8x128xf32> to vector<8x32xf32>
    %195 = math.tanh %194 : vector<8x32xf32>
    %196 = arith.mulf %192, %181 : vector<8x32xf32>
    %197 = arith.mulf %191, %195 : vector<8x32xf32>
    %198 = arith.addf %196, %197 : vector<8x32xf32>
    %199 = math.tanh %198 : vector<8x32xf32>
    %200 = arith.mulf %193, %199 : vector<8x32xf32>
    %c8_55 = arith.constant 8 : index
    %c0_56 = arith.constant 0 : index
    %201 = vector.load %arg8[%c8_55, %c0_56] : memref<64x128xf32, #tpu.memory_space<vmem>>, vector<8x128xf32>
    %202 = arith.truncf %200 : vector<8x32xf32> to vector<8x32xbf16>
    %cst_57 = arith.constant dense<0.000000e+00> : vector<8x128xf32>
    %203 = tpu.matmul %202, %179, %cst_57 {dimension_numbers = #tpu.dot_dimension_numbers<[1], [0], [0], [1], [0, 0, 1, 1], [], []>} : vector<8x32xbf16>, vector<32x128xbf16>, vector<8x128xf32> -> vector<8x128xf32>
    %204 = arith.addf %201, %203 : vector<8x128xf32>
    %205 = arith.negf %204 : vector<8x128xf32>
    %206 = math.exp %205 : vector<8x128xf32>
    %cst_58 = arith.constant 1.000000e+00 : f32
    %207 = vector.broadcast %cst_58 : f32 to vector<8x128xf32>
    %208 = arith.addf %207, %206 : vector<8x128xf32>
    %209 = arith.divf %207, %208 : vector<8x128xf32>
    %210 = vector.extract_strided_slice %209 {offsets = [0, 0], sizes = [8, 32], strides = [1, 1]} : vector<8x128xf32> to vector<8x32xf32>
    %211 = vector.extract_strided_slice %209 {offsets = [0, 32], sizes = [8, 32], strides = [1, 1]} : vector<8x128xf32> to vector<8x32xf32>
    %212 = vector.extract_strided_slice %209 {offsets = [0, 96], sizes = [8, 32], strides = [1, 1]} : vector<8x128xf32> to vector<8x32xf32>
    %213 = vector.extract_strided_slice %204 {offsets = [0, 64], sizes = [8, 32], strides = [1, 1]} : vector<8x128xf32> to vector<8x32xf32>
    %214 = math.tanh %213 : vector<8x32xf32>
    %215 = arith.mulf %211, %198 : vector<8x32xf32>
    %216 = arith.mulf %210, %214 : vector<8x32xf32>
    %217 = arith.addf %215, %216 : vector<8x32xf32>
    %218 = math.tanh %217 : vector<8x32xf32>
    %219 = arith.mulf %212, %218 : vector<8x32xf32>
    %c16_59 = arith.constant 16 : index
    %c0_60 = arith.constant 0 : index
    %220 = vector.load %arg8[%c16_59, %c0_60] : memref<64x128xf32, #tpu.memory_space<vmem>>, vector<8x128xf32>
    %221 = arith.truncf %219 : vector<8x32xf32> to vector<8x32xbf16>
    %cst_61 = arith.constant dense<0.000000e+00> : vector<8x128xf32>
    %222 = tpu.matmul %221, %179, %cst_61 {dimension_numbers = #tpu.dot_dimension_numbers<[1], [0], [0], [1], [0, 0, 1, 1], [], []>} : vector<8x32xbf16>, vector<32x128xbf16>, vector<8x128xf32> -> vector<8x128xf32>
    %223 = arith.addf %220, %222 : vector<8x128xf32>
    %224 = arith.negf %223 : vector<8x128xf32>
    %225 = math.exp %224 : vector<8x128xf32>
    %cst_62 = arith.constant 1.000000e+00 : f32
    %226 = vector.broadcast %cst_62 : f32 to vector<8x128xf32>
    %227 = arith.addf %226, %225 : vector<8x128xf32>
    %228 = arith.divf %226, %227 : vector<8x128xf32>
    %229 = vector.extract_strided_slice %228 {offsets = [0, 0], sizes = [8, 32], strides = [1, 1]} : vector<8x128xf32> to vector<8x32xf32>
    %230 = vector.extract_strided_slice %228 {offsets = [0, 32], sizes = [8, 32], strides = [1, 1]} : vector<8x128xf32> to vector<8x32xf32>
    %231 = vector.extract_strided_slice %228 {offsets = [0, 96], sizes = [8, 32], strides = [1, 1]} : vector<8x128xf32> to vector<8x32xf32>
    %232 = vector.extract_strided_slice %223 {offsets = [0, 64], sizes = [8, 32], strides = [1, 1]} : vector<8x128xf32> to vector<8x32xf32>
    %233 = math.tanh %232 : vector<8x32xf32>
    %234 = arith.mulf %230, %217 : vector<8x32xf32>
    %235 = arith.mulf %229, %233 : vector<8x32xf32>
    %236 = arith.addf %234, %235 : vector<8x32xf32>
    %237 = math.tanh %236 : vector<8x32xf32>
    %238 = arith.mulf %231, %237 : vector<8x32xf32>
    %c24_63 = arith.constant 24 : index
    %c0_64 = arith.constant 0 : index
    %239 = vector.load %arg8[%c24_63, %c0_64] : memref<64x128xf32, #tpu.memory_space<vmem>>, vector<8x128xf32>
    %240 = arith.truncf %238 : vector<8x32xf32> to vector<8x32xbf16>
    %cst_65 = arith.constant dense<0.000000e+00> : vector<8x128xf32>
    %241 = tpu.matmul %240, %179, %cst_65 {dimension_numbers = #tpu.dot_dimension_numbers<[1], [0], [0], [1], [0, 0, 1, 1], [], []>} : vector<8x32xbf16>, vector<32x128xbf16>, vector<8x128xf32> -> vector<8x128xf32>
    %242 = arith.addf %239, %241 : vector<8x128xf32>
    %243 = arith.negf %242 : vector<8x128xf32>
    %244 = math.exp %243 : vector<8x128xf32>
    %cst_66 = arith.constant 1.000000e+00 : f32
    %245 = vector.broadcast %cst_66 : f32 to vector<8x128xf32>
    %246 = arith.addf %245, %244 : vector<8x128xf32>
    %247 = arith.divf %245, %246 : vector<8x128xf32>
    %248 = vector.extract_strided_slice %247 {offsets = [0, 0], sizes = [8, 32], strides = [1, 1]} : vector<8x128xf32> to vector<8x32xf32>
    %249 = vector.extract_strided_slice %247 {offsets = [0, 32], sizes = [8, 32], strides = [1, 1]} : vector<8x128xf32> to vector<8x32xf32>
    %250 = vector.extract_strided_slice %247 {offsets = [0, 96], sizes = [8, 32], strides = [1, 1]} : vector<8x128xf32> to vector<8x32xf32>
    %251 = vector.extract_strided_slice %242 {offsets = [0, 64], sizes = [8, 32], strides = [1, 1]} : vector<8x128xf32> to vector<8x32xf32>
    %252 = math.tanh %251 : vector<8x32xf32>
    %253 = arith.mulf %249, %236 : vector<8x32xf32>
    %254 = arith.mulf %248, %252 : vector<8x32xf32>
    %255 = arith.addf %253, %254 : vector<8x32xf32>
    %256 = math.tanh %255 : vector<8x32xf32>
    %257 = arith.mulf %250, %256 : vector<8x32xf32>
    %c32_67 = arith.constant 32 : index
    %c0_68 = arith.constant 0 : index
    %258 = vector.load %arg8[%c32_67, %c0_68] : memref<64x128xf32, #tpu.memory_space<vmem>>, vector<8x128xf32>
    %259 = arith.truncf %257 : vector<8x32xf32> to vector<8x32xbf16>
    %cst_69 = arith.constant dense<0.000000e+00> : vector<8x128xf32>
    %260 = tpu.matmul %259, %179, %cst_69 {dimension_numbers = #tpu.dot_dimension_numbers<[1], [0], [0], [1], [0, 0, 1, 1], [], []>} : vector<8x32xbf16>, vector<32x128xbf16>, vector<8x128xf32> -> vector<8x128xf32>
    %261 = arith.addf %258, %260 : vector<8x128xf32>
    %262 = arith.negf %261 : vector<8x128xf32>
    %263 = math.exp %262 : vector<8x128xf32>
    %cst_70 = arith.constant 1.000000e+00 : f32
    %264 = vector.broadcast %cst_70 : f32 to vector<8x128xf32>
    %265 = arith.addf %264, %263 : vector<8x128xf32>
    %266 = arith.divf %264, %265 : vector<8x128xf32>
    %267 = vector.extract_strided_slice %266 {offsets = [0, 0], sizes = [8, 32], strides = [1, 1]} : vector<8x128xf32> to vector<8x32xf32>
    %268 = vector.extract_strided_slice %266 {offsets = [0, 32], sizes = [8, 32], strides = [1, 1]} : vector<8x128xf32> to vector<8x32xf32>
    %269 = vector.extract_strided_slice %266 {offsets = [0, 96], sizes = [8, 32], strides = [1, 1]} : vector<8x128xf32> to vector<8x32xf32>
    %270 = vector.extract_strided_slice %261 {offsets = [0, 64], sizes = [8, 32], strides = [1, 1]} : vector<8x128xf32> to vector<8x32xf32>
    %271 = math.tanh %270 : vector<8x32xf32>
    %272 = arith.mulf %268, %255 : vector<8x32xf32>
    %273 = arith.mulf %267, %271 : vector<8x32xf32>
    %274 = arith.addf %272, %273 : vector<8x32xf32>
    %275 = math.tanh %274 : vector<8x32xf32>
    %276 = arith.mulf %269, %275 : vector<8x32xf32>
    %c40_71 = arith.constant 40 : index
    %c0_72 = arith.constant 0 : index
    %277 = vector.load %arg8[%c40_71, %c0_72] : memref<64x128xf32, #tpu.memory_space<vmem>>, vector<8x128xf32>
    %278 = arith.truncf %276 : vector<8x32xf32> to vector<8x32xbf16>
    %cst_73 = arith.constant dense<0.000000e+00> : vector<8x128xf32>
    %279 = tpu.matmul %278, %179, %cst_73 {dimension_numbers = #tpu.dot_dimension_numbers<[1], [0], [0], [1], [0, 0, 1, 1], [], []>} : vector<8x32xbf16>, vector<32x128xbf16>, vector<8x128xf32> -> vector<8x128xf32>
    %280 = arith.addf %277, %279 : vector<8x128xf32>
    %281 = arith.negf %280 : vector<8x128xf32>
    %282 = math.exp %281 : vector<8x128xf32>
    %cst_74 = arith.constant 1.000000e+00 : f32
    %283 = vector.broadcast %cst_74 : f32 to vector<8x128xf32>
    %284 = arith.addf %283, %282 : vector<8x128xf32>
    %285 = arith.divf %283, %284 : vector<8x128xf32>
    %286 = vector.extract_strided_slice %285 {offsets = [0, 0], sizes = [8, 32], strides = [1, 1]} : vector<8x128xf32> to vector<8x32xf32>
    %287 = vector.extract_strided_slice %285 {offsets = [0, 32], sizes = [8, 32], strides = [1, 1]} : vector<8x128xf32> to vector<8x32xf32>
    %288 = vector.extract_strided_slice %285 {offsets = [0, 96], sizes = [8, 32], strides = [1, 1]} : vector<8x128xf32> to vector<8x32xf32>
    %289 = vector.extract_strided_slice %280 {offsets = [0, 64], sizes = [8, 32], strides = [1, 1]} : vector<8x128xf32> to vector<8x32xf32>
    %290 = math.tanh %289 : vector<8x32xf32>
    %291 = arith.mulf %287, %274 : vector<8x32xf32>
    %292 = arith.mulf %286, %290 : vector<8x32xf32>
    %293 = arith.addf %291, %292 : vector<8x32xf32>
    %294 = math.tanh %293 : vector<8x32xf32>
    %295 = arith.mulf %288, %294 : vector<8x32xf32>
    %c48_75 = arith.constant 48 : index
    %c0_76 = arith.constant 0 : index
    %296 = vector.load %arg8[%c48_75, %c0_76] : memref<64x128xf32, #tpu.memory_space<vmem>>, vector<8x128xf32>
    %297 = arith.truncf %295 : vector<8x32xf32> to vector<8x32xbf16>
    %cst_77 = arith.constant dense<0.000000e+00> : vector<8x128xf32>
    %298 = tpu.matmul %297, %179, %cst_77 {dimension_numbers = #tpu.dot_dimension_numbers<[1], [0], [0], [1], [0, 0, 1, 1], [], []>} : vector<8x32xbf16>, vector<32x128xbf16>, vector<8x128xf32> -> vector<8x128xf32>
    %299 = arith.addf %296, %298 : vector<8x128xf32>
    %300 = arith.negf %299 : vector<8x128xf32>
    %301 = math.exp %300 : vector<8x128xf32>
    %cst_78 = arith.constant 1.000000e+00 : f32
    %302 = vector.broadcast %cst_78 : f32 to vector<8x128xf32>
    %303 = arith.addf %302, %301 : vector<8x128xf32>
    %304 = arith.divf %302, %303 : vector<8x128xf32>
    %305 = vector.extract_strided_slice %304 {offsets = [0, 0], sizes = [8, 32], strides = [1, 1]} : vector<8x128xf32> to vector<8x32xf32>
    %306 = vector.extract_strided_slice %304 {offsets = [0, 32], sizes = [8, 32], strides = [1, 1]} : vector<8x128xf32> to vector<8x32xf32>
    %307 = vector.extract_strided_slice %304 {offsets = [0, 96], sizes = [8, 32], strides = [1, 1]} : vector<8x128xf32> to vector<8x32xf32>
    %308 = vector.extract_strided_slice %299 {offsets = [0, 64], sizes = [8, 32], strides = [1, 1]} : vector<8x128xf32> to vector<8x32xf32>
    %309 = math.tanh %308 : vector<8x32xf32>
    %310 = arith.mulf %306, %293 : vector<8x32xf32>
    %311 = arith.mulf %305, %309 : vector<8x32xf32>
    %312 = arith.addf %310, %311 : vector<8x32xf32>
    %313 = math.tanh %312 : vector<8x32xf32>
    %314 = arith.mulf %307, %313 : vector<8x32xf32>
    %c56_79 = arith.constant 56 : index
    %c0_80 = arith.constant 0 : index
    %315 = vector.load %arg8[%c56_79, %c0_80] : memref<64x128xf32, #tpu.memory_space<vmem>>, vector<8x128xf32>
    %316 = arith.truncf %314 : vector<8x32xf32> to vector<8x32xbf16>
    %cst_81 = arith.constant dense<0.000000e+00> : vector<8x128xf32>
    %317 = tpu.matmul %316, %179, %cst_81 {dimension_numbers = #tpu.dot_dimension_numbers<[1], [0], [0], [1], [0, 0, 1, 1], [], []>} : vector<8x32xbf16>, vector<32x128xbf16>, vector<8x128xf32> -> vector<8x128xf32>
    %318 = arith.addf %315, %317 : vector<8x128xf32>
    %319 = arith.negf %318 : vector<8x128xf32>
    %320 = math.exp %319 : vector<8x128xf32>
    %cst_82 = arith.constant 1.000000e+00 : f32
    %321 = vector.broadcast %cst_82 : f32 to vector<8x128xf32>
    %322 = arith.addf %321, %320 : vector<8x128xf32>
    %323 = arith.divf %321, %322 : vector<8x128xf32>
    %324 = vector.extract_strided_slice %323 {offsets = [0, 0], sizes = [8, 32], strides = [1, 1]} : vector<8x128xf32> to vector<8x32xf32>
    %325 = vector.extract_strided_slice %323 {offsets = [0, 32], sizes = [8, 32], strides = [1, 1]} : vector<8x128xf32> to vector<8x32xf32>
    %326 = vector.extract_strided_slice %323 {offsets = [0, 96], sizes = [8, 32], strides = [1, 1]} : vector<8x128xf32> to vector<8x32xf32>
    %327 = vector.extract_strided_slice %318 {offsets = [0, 64], sizes = [8, 32], strides = [1, 1]} : vector<8x128xf32> to vector<8x32xf32>
    %328 = math.tanh %327 : vector<8x32xf32>
    %329 = arith.mulf %325, %312 : vector<8x32xf32>
    %330 = arith.mulf %324, %328 : vector<8x32xf32>
    %331 = arith.addf %329, %330 : vector<8x32xf32>
    %332 = math.tanh %331 : vector<8x32xf32>
    %333 = arith.mulf %326, %332 : vector<8x32xf32>
    %c0_83 = arith.constant 0 : index
    %c0_84 = arith.constant 0 : index
    %334 = vector.load %arg7[%c0_83, %c0_84] : memref<8x32xf32, #tpu.memory_space<vmem>>, vector<8x32xf32>
    tpu.vector_store %arg7[%c0_83, %c0_84], %333 {strides = array<i32>} : memref<8x32xf32, #tpu.memory_space<vmem>>, vector<8x32xf32>,
    return
  }
}

</mosaic_0001>

<llo_original>
// kernel: lstm_model_forward.1
$region0: #{lstm_model_forward.1}
  #allocation0 [shape = 'u32[]', space=smem, size = 0x4, offset = 0x4, fixed_abs, tag = 'smem constant byte address 0x4 - core index']
  #allocation1 [shape = 'u32[144,128]{1,0:T(1,128)}', space=vmem, size = 0x12000, scoped, tag = 'internal scratch']
  #allocation2 [shape = 'f32[64,128]{1,0:T(8,128)}', space=vmem, size = 0x8000, scoped, tag = 'scratch operand']
  #allocation3 [shape = 'bf16[64,32]{1,0:T(8,128)(2,1)}', space=vmem, size = 0x4000, scoped, tag = 'scratch operand']
  %s0 = inlined_call_operand.vmem [shape: bf16[64,16], index: 0, kind: input, shape index: {}]
  %s1 = inlined_call_operand.vmem [shape: bf16[16,128], index: 1, kind: input, shape index: {}]
  %s2 = inlined_call_operand.vmem [shape: bf16[32,128], index: 2, kind: input, shape index: {}]
  %s3 = inlined_call_operand.vmem [shape: f32[1,128], index: 3, kind: input, shape index: {}]
  %s4 = inlined_call_operand.vmem [shape: bf16[32,128], index: 4, kind: input, shape index: {}]
  %s5 = inlined_call_operand.vmem [shape: bf16[32,128], index: 5, kind: input, shape index: {}]
  %s6 = inlined_call_operand.vmem [shape: f32[1,128], index: 6, kind: input, shape index: {}]
  %s7 = inlined_call_operand.vmem [shape: f32[8,32], index: 7, kind: output, shape index: {}]
  %s8 = sld [smem:[#allocation0]]
  $region38: #{lstm_model_forward.1} parent=0
    _
  %s10 = ssub.s32 1, %s8
  %s11 = scalar_select 0, %s10, %s8
  // Predicated region
  $region2: #{lstm_model_forward.1} parent=0 // pred_check
    _
  $region3: #{lstm_model_forward.1} parent=0 // pred_check_branch
    %13 = sbr.rel (0) target = $region5
  $region4: #{lstm_model_forward.1} parent=0 // pred_region
    _
  $region5: #{lstm_model_forward.1} parent=0 // pred_fallthru
    _
  // Predicated region
  $region6: #{lstm_model_forward.1} parent=0 // pred_check
    _
  $region7: #{lstm_model_forward.1} parent=0 // pred_check_branch
    %15 = sbr.rel (0) target = $region9
  $region8: #{lstm_model_forward.1} parent=0 // pred_region
    _
  $region9: #{lstm_model_forward.1} parent=0 // pred_fallthru
    _
  // Predicated region
  $region10: #{lstm_model_forward.1} parent=0 // pred_check
    _
  $region11: #{lstm_model_forward.1} parent=0 // pred_check_branch
    %17 = sbr.rel (0) target = $region13
  $region12: #{lstm_model_forward.1} parent=0 // pred_region
    _
  $region13: #{lstm_model_forward.1} parent=0 // pred_fallthru
    _
  // Predicated region
  $region14: #{lstm_model_forward.1} parent=0 // pred_check
    _
  $region15: #{lstm_model_forward.1} parent=0 // pred_check_branch
    %19 = sbr.rel (0) target = $region17
  $region16: #{lstm_model_forward.1} parent=0 // pred_region
    _
  $region17: #{lstm_model_forward.1} parent=0 // pred_fallthru
    _
  // Predicated region
  $region18: #{lstm_model_forward.1} parent=0 // pred_check
    _
  $region19: #{lstm_model_forward.1} parent=0 // pred_check_branch
    %21 = sbr.rel (0) target = $region21
  $region20: #{lstm_model_forward.1} parent=0 // pred_region
    _
  $region21: #{lstm_model_forward.1} parent=0 // pred_fallthru
    _
  // Predicated region
  $region22: #{lstm_model_forward.1} parent=0 // pred_check
    _
  $region23: #{lstm_model_forward.1} parent=0 // pred_check_branch
    %23 = sbr.rel (0) target = $region25
  $region24: #{lstm_model_forward.1} parent=0 // pred_region
    _
  $region25: #{lstm_model_forward.1} parent=0 // pred_fallthru
    _
  // Predicated region
  $region26: #{lstm_model_forward.1} parent=0 // pred_check
    _
  $region27: #{lstm_model_forward.1} parent=0 // pred_check_branch
    %25 = sbr.rel (0) target = $region29
  $region28: #{lstm_model_forward.1} parent=0 // pred_region
    _
  $region29: #{lstm_model_forward.1} parent=0 // pred_fallthru
    _
  %v27 = vld [vmem:[%s0] sm:$0xf]
  %v28 = vld [vmem:[%s0 + $0x4] sm:$0xf]
  %v29 = vld [vmem:[%s0 + $0x8] sm:$0xf]
  %v30 = vld [vmem:[%s0 + $0xc] sm:$0xf]
  %v31 = vld [vmem:[%s0 + $0x10] sm:$0xf]
  %v32 = vld [vmem:[%s0 + $0x14] sm:$0xf]
  %v33 = vld [vmem:[%s0 + $0x18] sm:$0xf]
  %v34 = vld [vmem:[%s0 + $0x1c] sm:$0xf]
  %v35 = vld [vmem:[%s1] sm:$0xf]
  %v36 = vld [vmem:[%s1 + $0x4] sm:$0xf]
  %v37 = vld [vmem:[%s3] sm:$0x1]
  %v39 = vlaneseq
  %v40 = vshrl.u32 %v39, 7
  %v41 = vsub.s32 0, %v40
  %v42 = vrot.slane %v37, %v41
  %v52 = vunpack.c.l.b16 %v27
  %v53 = vunpack.c.l.b16 %v28
  %v54 = vunpack.c.l.b16 %v29
  %v55 = vunpack.c.l.b16 %v30
  %v56 = vunpack.c.l.b16 %v31
  %v57 = vunpack.c.l.b16 %v32
  %v58 = vunpack.c.l.b16 %v33
  %v59 = vunpack.c.l.b16 %v34
  %v60 = vpack.c.b16 %v53, %v52
  %v61 = vpack.c.b16 %v55, %v54
  %v62 = vpack.c.b16 %v57, %v56
  %v63 = vpack.c.b16 %v59, %v58
  %v66 = vunpack.c.l.b16 %v35
  %v67 = vunpack.c.l.b16 %v36
  %v68 = vpack.c.b16 %v67, %v66
  %vm70 = vcmask 130048
  %v72 = vsel %vm70, %v60, 0
  %v75 = vsel %vm70, %v61, 0
  %v78 = vsel %vm70, %v62, 0
  %v81 = vsel %vm70, %v63, 0
  %83 = vmatprep.subr.bf16.mxu0 0
  %84 = vmatpush1.bf16.msra.mxu0 0
  %85 = vmatprep.subr.bf16.mxu0 0
  %86 = vmatpush1.bf16.msra.mxu0 0
  %87 = vmatprep.subr.bf16.mxu0 0
  %88 = vmatpush1.bf16.msra.mxu0 0
  %89 = vmatprep.subr.bf16.mxu0 0
  %90 = vmatpush1.bf16.msra.mxu0 0
  %91 = vmatprep.subr.bf16.mxu0 0
  %92 = vmatpush1.bf16.msra.mxu0 0
  %93 = vmatprep.subr.bf16.mxu0 0
  %94 = vmatpush1.bf16.msra.mxu0 0
  %95 = vmatprep.subr.bf16.mxu0 0
  %96 = vmatpush1.bf16.msra.mxu0 0
  %97 = vmatprep.subr.bf16.mxu0 0
  %98 = vmatpush1.bf16.msra.mxu0 %v68
  %99 = vmatprep.subr.bf16.mxu0 0
  %100 = vmatpush2.bf16.msra.mxu0 0
  %101 = vmatprep.subr.bf16.mxu0 0
  %102 = vmatpush2.bf16.msra.mxu0 0
  %103 = vmatprep.subr.bf16.mxu0 0
  %104 = vmatpush2.bf16.msra.mxu0 0
  %105 = vmatprep.subr.bf16.mxu0 0
  %106 = vmatpush2.bf16.msra.mxu0 0
  %107 = vmatprep.subr.bf16.mxu0 0
  %108 = vmatpush2.bf16.msra.mxu0 0
  %109 = vmatprep.subr.bf16.mxu0 0
  %110 = vmatpush2.bf16.msra.mxu0 0
  %111 = vmatprep.subr.bf16.mxu0 0
  %112 = vmatpush2.bf16.msra.mxu0 0
  %113 = vmatprep.subr.bf16.mxu0 0
  %114 = vmatpush2.bf16.msra.mxu0 0
  %115 = vmatprep.mubr.bf16.mxu0 0
  %116 = vmatmul.mubr.bf16.gmra.mxu0 %v72
  %v117 = vpop.f32.mrf.mxu0
  %v118 = vadd.f32 %v42, %v117
  %v119 = vpop.f32.mrf.mxu0
  %v120 = vpop.f32.mrf.mxu0
  %v121 = vadd.f32 %v42, %v120
  %v122 = vpop.f32.mrf.mxu0
  %123 = vmatprep.mubr.bf16.mxu0 0
  %124 = vmatmul.mubr.bf16.gmra.mxu0 %v75
  %v125 = vpop.f32.mrf.mxu0
  %v126 = vadd.f32 %v42, %v125
  %v127 = vpop.f32.mrf.mxu0
  %v128 = vpop.f32.mrf.mxu0
  %v129 = vadd.f32 %v42, %v128
  %v130 = vpop.f32.mrf.mxu0
  %131 = vmatprep.mubr.bf16.mxu0 0
  %132 = vmatmul.mubr.bf16.gmra.mxu0 %v78
  %v133 = vpop.f32.mrf.mxu0
  %v134 = vadd.f32 %v42, %v133
  %v135 = vpop.f32.mrf.mxu0
  %v136 = vpop.f32.mrf.mxu0
  %v137 = vadd.f32 %v42, %v136
  %v138 = vpop.f32.mrf.mxu0
  %139 = vmatprep.mubr.bf16.mxu0 0
  %140 = vmatmul.mubr.bf16.gmra.mxu0 %v81
  %v141 = vpop.f32.mrf.mxu0
  %v142 = vadd.f32 %v42, %v141
  %v143 = vpop.f32.mrf.mxu0
  %v144 = vpop.f32.mrf.mxu0
  %v145 = vadd.f32 %v42, %v144
  %v146 = vpop.f32.mrf.mxu0
  %147 = vdwg.mxu0
  %148 = vst [vmem:[#allocation2] sm:$0xff] %v118
  %149 = vst [vmem:[#allocation2 + $0x8] sm:$0xff] %v121
  %150 = vst [vmem:[#allocation2 + $0x10] sm:$0xff] %v126
  %151 = vst [vmem:[#allocation2 + $0x18] sm:$0xff] %v129
  %152 = vst [vmem:[#allocation2 + $0x20] sm:$0xff] %v134
  %153 = vst [vmem:[#allocation2 + $0x28] sm:$0xff] %v137
  %154 = vst [vmem:[#allocation2 + $0x30] sm:$0xff] %v142
  %155 = vst [vmem:[#allocation2 + $0x38] sm:$0xff] %v145
  %v156 = vld [vmem:[%s2] sm:$0xf]
  %v157 = vld [vmem:[%s2 + $0x4] sm:$0xf]
  %v158 = vld [vmem:[%s2 + $0x8] sm:$0xf]
  %v159 = vld [vmem:[%s2 + $0xc] sm:$0xf]
  %v160 = vld [vmem:[#allocation2] sm:$0xff]
  %v165 = vunpack.c.l.b16 %v156
  %v166 = vunpack.c.l.b16 %v157
  %v167 = vunpack.c.l.b16 %v158
  %v168 = vunpack.c.l.b16 %v159
  %v169 = vpack.c.b16 %v166, %v165
  %v170 = vpack.c.b16 %v168, %v167
  %vm173 = vcmask 261120
  %v175 = vsel %vm173, 0, 0
  %177 = vmatprep.subr.bf16.mxu0 0
  %178 = vmatpush1.bf16.msra.mxu0 0
  %179 = vmatprep.subr.bf16.mxu0 0
  %180 = vmatpush1.bf16.msra.mxu0 0
  %181 = vmatprep.subr.bf16.mxu0 0
  %182 = vmatpush1.bf16.msra.mxu0 0
  %183 = vmatprep.subr.bf16.mxu0 0
  %184 = vmatpush1.bf16.msra.mxu0 0
  %185 = vmatprep.subr.bf16.mxu0 0
  %186 = vmatpush1.bf16.msra.mxu0 0
  %187 = vmatprep.subr.bf16.mxu0 0
  %188 = vmatpush1.bf16.msra.mxu0 0
  %189 = vmatprep.subr.bf16.mxu0 0
  %190 = vmatpush1.bf16.msra.mxu0 %v170
  %191 = vmatprep.subr.bf16.mxu0 0
  %192 = vmatpush1.bf16.msra.mxu0 %v169
  %193 = vmatprep.subr.bf16.mxu0 0
  %194 = vmatpush2.bf16.msra.mxu0 0
  %195 = vmatprep.subr.bf16.mxu0 0
  %196 = vmatpush2.bf16.msra.mxu0 0
  %197 = vmatprep.subr.bf16.mxu0 0
  %198 = vmatpush2.bf16.msra.mxu0 0
  %199 = vmatprep.subr.bf16.mxu0 0
  %200 = vmatpush2.bf16.msra.mxu0 0
  %201 = vmatprep.subr.bf16.mxu0 0
  %202 = vmatpush2.bf16.msra.mxu0 0
  %203 = vmatprep.subr.bf16.mxu0 0
  %204 = vmatpush2.bf16.msra.mxu0 0
  %205 = vmatprep.subr.bf16.mxu0 0
  %206 = vmatpush2.bf16.msra.mxu0 0
  %207 = vmatprep.subr.bf16.mxu0 0
  %208 = vmatpush2.bf16.msra.mxu0 0
  %209 = vmatprep.mubr.bf16.mxu0 0
  %210 = vmatmul.mubr.bf16.gmra.mxu0 %v175
  %v211 = vpop.f32.mrf.mxu0
  %v212 = vadd.f32 0.0, %v211
  %v213 = vpop.f32.mrf.mxu0
  %v214 = vpop.f32.mrf.mxu0
  %v215 = vpop.f32.mrf.mxu0
  %216 = vdwg.mxu0
  %v217 = vadd.f32 %v160, %v212
  %v218 = vxor.u32 %v217, 2147483648
  %v219 = vmul.f32 %v218, 1.442695
  %v220 = vpow.pop %v219
  %v221 = vadd.f32 %v220, 1.0
  %v222 = vrcp.pop %v221
  %v223 = vmul.f32 1.0, %v222
  %v224 = vtanh.pop %v217
  %v225 = vmul.f32 %v223, 0.0
  %227 = vrot.lane.b32.xlu0 %v224, 64
  %v228 = vpop.permute.xlu0 %227
  %v230 = vmul.f32 %v223, %v228
  %232 = vrot.lane.b32.xlu0 %v230, 32
  %v233 = vpop.permute.xlu0 %232
  %v235 = vadd.f32 %v225, %v233
  %v236 = vtanh.pop %v235
  %238 = vrot.lane.b32.xlu0 %v236, 64
  %v239 = vpop.permute.xlu0 %238
  %v241 = vmul.f32 %v223, %v239
  %v242 = vpack.c.bf16 %v241, %v241
  %v243 = vld [vmem:[#allocation2 + $0x8] sm:$0xff]
  %245 = vrot.lane.b32.xlu0 %v242, 32
  %v246 = vpop.permute.xlu0 %245
  %v248 = vsel %vm173, %v246, 0
  %250 = vmatprep.subr.bf16.mxu0 0
  %251 = vmatpush1.bf16.msra.mxu0 0
  %252 = vmatprep.subr.bf16.mxu0 0
  %253 = vmatpush1.bf16.msra.mxu0 0
  %254 = vmatprep.subr.bf16.mxu0 0
  %255 = vmatpush1.bf16.msra.mxu0 0
  %256 = vmatprep.subr.bf16.mxu0 0
  %257 = vmatpush1.bf16.msra.mxu0 0
  %258 = vmatprep.subr.bf16.mxu0 0
  %259 = vmatpush1.bf16.msra.mxu0 0
  %260 = vmatprep.subr.bf16.mxu0 0
  %261 = vmatpush1.bf16.msra.mxu0 0
  %262 = vmatprep.subr.bf16.mxu0 0
  %263 = vmatpush1.bf16.msra.mxu0 %v170
  %264 = vmatprep.subr.bf16.mxu0 0
  %265 = vmatpush1.bf16.msra.mxu0 %v169
  %266 = vmatprep.subr.bf16.mxu0 0
  %267 = vmatpush2.bf16.msra.mxu0 0
  %268 = vmatprep.subr.bf16.mxu0 0
  %269 = vmatpush2.bf16.msra.mxu0 0
  %270 = vmatprep.subr.bf16.mxu0 0
  %271 = vmatpush2.bf16.msra.mxu0 0
  %272 = vmatprep.subr.bf16.mxu0 0
  %273 = vmatpush2.bf16.msra.mxu0 0
  %274 = vmatprep.subr.bf16.mxu0 0
  %275 = vmatpush2.bf16.msra.mxu0 0
  %276 = vmatprep.subr.bf16.mxu0 0
  %277 = vmatpush2.bf16.msra.mxu0 0
  %278 = vmatprep.subr.bf16.mxu0 0
  %279 = vmatpush2.bf16.msra.mxu0 0
  %280 = vmatprep.subr.bf16.mxu0 0
  %281 = vmatpush2.bf16.msra.mxu0 0
  %282 = vmatprep.mubr.bf16.mxu0 0
  %283 = vmatmul.mubr.bf16.gmra.mxu0 %v248
  %v284 = vpop.f32.mrf.mxu0
  %v285 = vadd.f32 0.0, %v284
  %v286 = vpop.f32.mrf.mxu0
  %v287 = vpop.f32.mrf.mxu0
  %v288 = vpop.f32.mrf.mxu0
  %289 = vdwg.mxu0
  %v290 = vadd.f32 %v243, %v285
  %v291 = vxor.u32 %v290, 2147483648
  %v292 = vmul.f32 %v291, 1.442695
  %v293 = vpow.pop %v292
  %v294 = vadd.f32 %v293, 1.0
  %v295 = vrcp.pop %v294
  %v296 = vmul.f32 1.0, %v295
  %v297 = vtanh.pop %v290
  %v298 = vmul.f32 %v296, %v235
  %300 = vrot.lane.b32.xlu0 %v297, 64
  %v301 = vpop.permute.xlu0 %300
  %v303 = vmul.f32 %v296, %v301
  %305 = vrot.lane.b32.xlu0 %v303, 32
  %v306 = vpop.permute.xlu0 %305
  %v308 = vadd.f32 %v298, %v306
  %v309 = vtanh.pop %v308
  %311 = vrot.lane.b32.xlu0 %v309, 64
  %v312 = vpop.permute.xlu0 %311
  %v314 = vmul.f32 %v296, %v312
  %v315 = vpack.c.bf16 %v314, %v314
  %v316 = vld [vmem:[#allocation2 + $0x10] sm:$0xff]
  %318 = vrot.lane.b32.xlu0 %v315, 32
  %v319 = vpop.permute.xlu0 %318
  %v321 = vsel %vm173, %v319, 0
  %323 = vmatprep.subr.bf16.mxu0 0
  %324 = vmatpush1.bf16.msra.mxu0 0
  %325 = vmatprep.subr.bf16.mxu0 0
  %326 = vmatpush1.bf16.msra.mxu0 0
  %327 = vmatprep.subr.bf16.mxu0 0
  %328 = vmatpush1.bf16.msra.mxu0 0
  %329 = vmatprep.subr.bf16.mxu0 0
  %330 = vmatpush1.bf16.msra.mxu0 0
  %331 = vmatprep.subr.bf16.mxu0 0
  %332 = vmatpush1.bf16.msra.mxu0 0
  %333 = vmatprep.subr.bf16.mxu0 0
  %334 = vmatpush1.bf16.msra.mxu0 0
  %335 = vmatprep.subr.bf16.mxu0 0
  %336 = vmatpush1.bf16.msra.mxu0 %v170
  %337 = vmatprep.subr.bf16.mxu0 0
  %338 = vmatpush1.bf16.msra.mxu0 %v169
  %339 = vmatprep.subr.bf16.mxu0 0
  %340 = vmatpush2.bf16.msra.mxu0 0
  %341 = vmatprep.subr.bf16.mxu0 0
  %342 = vmatpush2.bf16.msra.mxu0 0
  %343 = vmatprep.subr.bf16.mxu0 0
  %344 = vmatpush2.bf16.msra.mxu0 0
  %345 = vmatprep.subr.bf16.mxu0 0
  %346 = vmatpush2.bf16.msra.mxu0 0
  %347 = vmatprep.subr.bf16.mxu0 0
  %348 = vmatpush2.bf16.msra.mxu0 0
  %349 = vmatprep.subr.bf16.mxu0 0
  %350 = vmatpush2.bf16.msra.mxu0 0
  %351 = vmatprep.subr.bf16.mxu0 0
  %352 = vmatpush2.bf16.msra.mxu0 0
  %353 = vmatprep.subr.bf16.mxu0 0
  %354 = vmatpush2.bf16.msra.mxu0 0
  %355 = vmatprep.mubr.bf16.mxu0 0
  %356 = vmatmul.mubr.bf16.gmra.mxu0 %v321
  %v357 = vpop.f32.mrf.mxu0
  %v358 = vadd.f32 0.0, %v357
  %v359 = vpop.f32.mrf.mxu0
  %v360 = vpop.f32.mrf.mxu0
  %v361 = vpop.f32.mrf.mxu0
  %362 = vdwg.mxu0
  %v363 = vadd.f32 %v316, %v358
  %v364 = vxor.u32 %v363, 2147483648
  %v365 = vmul.f32 %v364, 1.442695
  %v366 = vpow.pop %v365
  %v367 = vadd.f32 %v366, 1.0
  %v368 = vrcp.pop %v367
  %v369 = vmul.f32 1.0, %v368
  %v370 = vtanh.pop %v363
  %v371 = vmul.f32 %v369, %v308
  %373 = vrot.lane.b32.xlu0 %v370, 64
  %v374 = vpop.permute.xlu0 %373
  %v376 = vmul.f32 %v369, %v374
  %378 = vrot.lane.b32.xlu0 %v376, 32
  %v379 = vpop.permute.xlu0 %378
  %v381 = vadd.f32 %v371, %v379
  %v382 = vtanh.pop %v381
  %384 = vrot.lane.b32.xlu0 %v382, 64
  %v385 = vpop.permute.xlu0 %384
  %v387 = vmul.f32 %v369, %v385
  %v388 = vpack.c.bf16 %v387, %v387
  %v389 = vld [vmem:[#allocation2 + $0x18] sm:$0xff]
  %391 = vrot.lane.b32.xlu0 %v388, 32
  %v392 = vpop.permute.xlu0 %391
  %v394 = vsel %vm173, %v392, 0
  %396 = vmatprep.subr.bf16.mxu0 0
  %397 = vmatpush1.bf16.msra.mxu0 0
  %398 = vmatprep.subr.bf16.mxu0 0
  %399 = vmatpush1.bf16.msra.mxu0 0
  %400 = vmatprep.subr.bf16.mxu0 0
  %401 = vmatpush1.bf16.msra.mxu0 0
  %402 = vmatprep.subr.bf16.mxu0 0
  %403 = vmatpush1.bf16.msra.mxu0 0
  %404 = vmatprep.subr.bf16.mxu0 0
  %405 = vmatpush1.bf16.msra.mxu0 0
  %406 = vmatprep.subr.bf16.mxu0 0
  %407 = vmatpush1.bf16.msra.mxu0 0
  %408 = vmatprep.subr.bf16.mxu0 0
  %409 = vmatpush1.bf16.msra.mxu0 %v170
  %410 = vmatprep.subr.bf16.mxu0 0
  %411 = vmatpush1.bf16.msra.mxu0 %v169
  %412 = vmatprep.subr.bf16.mxu0 0
  %413 = vmatpush2.bf16.msra.mxu0 0
  %414 = vmatprep.subr.bf16.mxu0 0
  %415 = vmatpush2.bf16.msra.mxu0 0
  %416 = vmatprep.subr.bf16.mxu0 0
  %417 = vmatpush2.bf16.msra.mxu0 0
  %418 = vmatprep.subr.bf16.mxu0 0
  %419 = vmatpush2.bf16.msra.mxu0 0
  %420 = vmatprep.subr.bf16.mxu0 0
  %421 = vmatpush2.bf16.msra.mxu0 0
  %422 = vmatprep.subr.bf16.mxu0 0
  %423 = vmatpush2.bf16.msra.mxu0 0
  %424 = vmatprep.subr.bf16.mxu0 0
  %425 = vmatpush2.bf16.msra.mxu0 0
  %426 = vmatprep.subr.bf16.mxu0 0
  %427 = vmatpush2.bf16.msra.mxu0 0
  %428 = vmatprep.mubr.bf16.mxu0 0
  %429 = vmatmul.mubr.bf16.gmra.mxu0 %v394
  %v430 = vpop.f32.mrf.mxu0
  %v431 = vadd.f32 0.0, %v430
  %v432 = vpop.f32.mrf.mxu0
  %v433 = vpop.f32.mrf.mxu0
  %v434 = vpop.f32.mrf.mxu0
  %435 = vdwg.mxu0
  %v436 = vadd.f32 %v389, %v431
  %v437 = vxor.u32 %v436, 2147483648
  %v438 = vmul.f32 %v437, 1.442695
  %v439 = vpow.pop %v438
  %v440 = vadd.f32 %v439, 1.0
  %v441 = vrcp.pop %v440
  %v442 = vmul.f32 1.0, %v441
  %v443 = vtanh.pop %v436
  %v444 = vmul.f32 %v442, %v381
  %446 = vrot.lane.b32.xlu0 %v443, 64
  %v447 = vpop.permute.xlu0 %446
  %v449 = vmul.f32 %v442, %v447
  %451 = vrot.lane.b32.xlu0 %v449, 32
  %v452 = vpop.permute.xlu0 %451
  %v454 = vadd.f32 %v444, %v452
  %v455 = vtanh.pop %v454
  %457 = vrot.lane.b32.xlu0 %v455, 64
  %v458 = vpop.permute.xlu0 %457
  %v460 = vmul.f32 %v442, %v458
  %v461 = vpack.c.bf16 %v460, %v460
  %v462 = vld [vmem:[#allocation2 + $0x20] sm:$0xff]
  %464 = vrot.lane.b32.xlu0 %v461, 32
  %v465 = vpop.permute.xlu0 %464
  %v467 = vsel %vm173, %v465, 0
  %469 = vmatprep.subr.bf16.mxu0 0
  %470 = vmatpush1.bf16.msra.mxu0 0
  %471 = vmatprep.subr.bf16.mxu0 0
  %472 = vmatpush1.bf16.msra.mxu0 0
  %473 = vmatprep.subr.bf16.mxu0 0
  %474 = vmatpush1.bf16.msra.mxu0 0
  %475 = vmatprep.subr.bf16.mxu0 0
  %476 = vmatpush1.bf16.msra.mxu0 0
  %477 = vmatprep.subr.bf16.mxu0 0
  %478 = vmatpush1.bf16.msra.mxu0 0
  %479 = vmatprep.subr.bf16.mxu0 0
  %480 = vmatpush1.bf16.msra.mxu0 0
  %481 = vmatprep.subr.bf16.mxu0 0
  %482 = vmatpush1.bf16.msra.mxu0 %v170
  %483 = vmatprep.subr.bf16.mxu0 0
  %484 = vmatpush1.bf16.msra.mxu0 %v169
  %485 = vmatprep.subr.bf16.mxu0 0
  %486 = vmatpush2.bf16.msra.mxu0 0
  %487 = vmatprep.subr.bf16.mxu0 0
  %488 = vmatpush2.bf16.msra.mxu0 0
  %489 = vmatprep.subr.bf16.mxu0 0
  %490 = vmatpush2.bf16.msra.mxu0 0
  %491 = vmatprep.subr.bf16.mxu0 0
  %492 = vmatpush2.bf16.msra.mxu0 0
  %493 = vmatprep.subr.bf16.mxu0 0
  %494 = vmatpush2.bf16.msra.mxu0 0
  %495 = vmatprep.subr.bf16.mxu0 0
  %496 = vmatpush2.bf16.msra.mxu0 0
  %497 = vmatprep.subr.bf16.mxu0 0
  %498 = vmatpush2.bf16.msra.mxu0 0
  %499 = vmatprep.subr.bf16.mxu0 0
  %500 = vmatpush2.bf16.msra.mxu0 0
  %501 = vmatprep.mubr.bf16.mxu0 0
  %502 = vmatmul.mubr.bf16.gmra.mxu0 %v467
  %v503 = vpop.f32.mrf.mxu0
  %v504 = vadd.f32 0.0, %v503
  %v505 = vpop.f32.mrf.mxu0
  %v506 = vpop.f32.mrf.mxu0
  %v507 = vpop.f32.mrf.mxu0
  %508 = vdwg.mxu0
  %v509 = vadd.f32 %v462, %v504
  %v510 = vxor.u32 %v509, 2147483648
  %v511 = vmul.f32 %v510, 1.442695
  %v512 = vpow.pop %v511
  %v513 = vadd.f32 %v512, 1.0
  %v514 = vrcp.pop %v513
  %v515 = vmul.f32 1.0, %v514
  %v516 = vtanh.pop %v509
  %v517 = vmul.f32 %v515, %v454
  %519 = vrot.lane.b32.xlu0 %v516, 64
  %v520 = vpop.permute.xlu0 %519
  %v522 = vmul.f32 %v515, %v520
  %524 = vrot.lane.b32.xlu0 %v522, 32
  %v525 = vpop.permute.xlu0 %524
  %v527 = vadd.f32 %v517, %v525
  %v528 = vtanh.pop %v527
  %530 = vrot.lane.b32.xlu0 %v528, 64
  %v531 = vpop.permute.xlu0 %530
  %v533 = vmul.f32 %v515, %v531
  %v534 = vpack.c.bf16 %v533, %v533
  %v535 = vld [vmem:[#allocation2 + $0x28] sm:$0xff]
  %537 = vrot.lane.b32.xlu0 %v534, 32
  %v538 = vpop.permute.xlu0 %537
  %v540 = vsel %vm173, %v538, 0
  %542 = vmatprep.subr.bf16.mxu0 0
  %543 = vmatpush1.bf16.msra.mxu0 0
  %544 = vmatprep.subr.bf16.mxu0 0
  %545 = vmatpush1.bf16.msra.mxu0 0
  %546 = vmatprep.subr.bf16.mxu0 0
  %547 = vmatpush1.bf16.msra.mxu0 0
  %548 = vmatprep.subr.bf16.mxu0 0
  %549 = vmatpush1.bf16.msra.mxu0 0
  %550 = vmatprep.subr.bf16.mxu0 0
  %551 = vmatpush1.bf16.msra.mxu0 0
  %552 = vmatprep.subr.bf16.mxu0 0
  %553 = vmatpush1.bf16.msra.mxu0 0
  %554 = vmatprep.subr.bf16.mxu0 0
  %555 = vmatpush1.bf16.msra.mxu0 %v170
  %556 = vmatprep.subr.bf16.mxu0 0
  %557 = vmatpush1.bf16.msra.mxu0 %v169
  %558 = vmatprep.subr.bf16.mxu0 0
  %559 = vmatpush2.bf16.msra.mxu0 0
  %560 = vmatprep.subr.bf16.mxu0 0
  %561 = vmatpush2.bf16.msra.mxu0 0
  %562 = vmatprep.subr.bf16.mxu0 0
  %563 = vmatpush2.bf16.msra.mxu0 0
  %564 = vmatprep.subr.bf16.mxu0 0
  %565 = vmatpush2.bf16.msra.mxu0 0
  %566 = vmatprep.subr.bf16.mxu0 0
  %567 = vmatpush2.bf16.msra.mxu0 0
  %568 = vmatprep.subr.bf16.mxu0 0
  %569 = vmatpush2.bf16.msra.mxu0 0
  %570 = vmatprep.subr.bf16.mxu0 0
  %571 = vmatpush2.bf16.msra.mxu0 0
  %572 = vmatprep.subr.bf16.mxu0 0
  %573 = vmatpush2.bf16.msra.mxu0 0
  %574 = vmatprep.mubr.bf16.mxu0 0
  %575 = vmatmul.mubr.bf16.gmra.mxu0 %v540
  %v576 = vpop.f32.mrf.mxu0
  %v577 = vadd.f32 0.0, %v576
  %v578 = vpop.f32.mrf.mxu0
  %v579 = vpop.f32.mrf.mxu0
  %v580 = vpop.f32.mrf.mxu0
  %581 = vdwg.mxu0
  %v582 = vadd.f32 %v535, %v577
  %v583 = vxor.u32 %v582, 2147483648
  %v584 = vmul.f32 %v583, 1.442695
  %v585 = vpow.pop %v584
  %v586 = vadd.f32 %v585, 1.0
  %v587 = vrcp.pop %v586
  %v588 = vmul.f32 1.0, %v587
  %v589 = vtanh.pop %v582
  %v590 = vmul.f32 %v588, %v527
  %592 = vrot.lane.b32.xlu0 %v589, 64
  %v593 = vpop.permute.xlu0 %592
  %v595 = vmul.f32 %v588, %v593
  %597 = vrot.lane.b32.xlu0 %v595, 32
  %v598 = vpop.permute.xlu0 %597
  %v600 = vadd.f32 %v590, %v598
  %v601 = vtanh.pop %v600
  %603 = vrot.lane.b32.xlu0 %v601, 64
  %v604 = vpop.permute.xlu0 %603
  %v606 = vmul.f32 %v588, %v604
  %v607 = vpack.c.bf16 %v606, %v606
  %v608 = vld [vmem:[#allocation2 + $0x30] sm:$0xff]
  %610 = vrot.lane.b32.xlu0 %v607, 32
  %v611 = vpop.permute.xlu0 %610
  %v613 = vsel %vm173, %v611, 0
  %615 = vmatprep.subr.bf16.mxu0 0
  %616 = vmatpush1.bf16.msra.mxu0 0
  %617 = vmatprep.subr.bf16.mxu0 0
  %618 = vmatpush1.bf16.msra.mxu0 0
  %619 = vmatprep.subr.bf16.mxu0 0
  %620 = vmatpush1.bf16.msra.mxu0 0
  %621 = vmatprep.subr.bf16.mxu0 0
  %622 = vmatpush1.bf16.msra.mxu0 0
  %623 = vmatprep.subr.bf16.mxu0 0
  %624 = vmatpush1.bf16.msra.mxu0 0
  %625 = vmatprep.subr.bf16.mxu0 0
  %626 = vmatpush1.bf16.msra.mxu0 0
  %627 = vmatprep.subr.bf16.mxu0 0
  %628 = vmatpush1.bf16.msra.mxu0 %v170
  %629 = vmatprep.subr.bf16.mxu0 0
  %630 = vmatpush1.bf16.msra.mxu0 %v169
  %631 = vmatprep.subr.bf16.mxu0 0
  %632 = vmatpush2.bf16.msra.mxu0 0
  %633 = vmatprep.subr.bf16.mxu0 0
  %634 = vmatpush2.bf16.msra.mxu0 0
  %635 = vmatprep.subr.bf16.mxu0 0
  %636 = vmatpush2.bf16.msra.mxu0 0
  %637 = vmatprep.subr.bf16.mxu0 0
  %638 = vmatpush2.bf16.msra.mxu0 0
  %639 = vmatprep.subr.bf16.mxu0 0
  %640 = vmatpush2.bf16.msra.mxu0 0
  %641 = vmatprep.subr.bf16.mxu0 0
  %642 = vmatpush2.bf16.msra.mxu0 0
  %643 = vmatprep.subr.bf16.mxu0 0
  %644 = vmatpush2.bf16.msra.mxu0 0
  %645 = vmatprep.subr.bf16.mxu0 0
  %646 = vmatpush2.bf16.msra.mxu0 0
  %647 = vmatprep.mubr.bf16.mxu0 0
  %648 = vmatmul.mubr.bf16.gmra.mxu0 %v613
  %v649 = vpop.f32.mrf.mxu0
  %v650 = vadd.f32 0.0, %v649
  %v651 = vpop.f32.mrf.mxu0
  %v652 = vpop.f32.mrf.mxu0
  %v653 = vpop.f32.mrf.mxu0
  %654 = vdwg.mxu0
  %v655 = vadd.f32 %v608, %v650
  %v656 = vxor.u32 %v655, 2147483648
  %v657 = vmul.f32 %v656, 1.442695
  %v658 = vpow.pop %v657
  %v659 = vadd.f32 %v658, 1.0
  %v660 = vrcp.pop %v659
  %v661 = vmul.f32 1.0, %v660
  %v662 = vtanh.pop %v655
  %v663 = vmul.f32 %v661, %v600
  %665 = vrot.lane.b32.xlu0 %v662, 64
  %v666 = vpop.permute.xlu0 %665
  %v668 = vmul.f32 %v661, %v666
  %670 = vrot.lane.b32.xlu0 %v668, 32
  %v671 = vpop.permute.xlu0 %670
  %v673 = vadd.f32 %v663, %v671
  %v674 = vtanh.pop %v673
  %676 = vrot.lane.b32.xlu0 %v674, 64
  %v677 = vpop.permute.xlu0 %676
  %v679 = vmul.f32 %v661, %v677
  %v680 = vpack.c.bf16 %v679, %v679
  %v681 = vld [vmem:[#allocation2 + $0x38] sm:$0xff]
  %683 = vrot.lane.b32.xlu0 %v680, 32
  %v684 = vpop.permute.xlu0 %683
  %v686 = vsel %vm173, %v684, 0
  %688 = vmatprep.subr.bf16.mxu0 0
  %689 = vmatpush1.bf16.msra.mxu0 0
  %690 = vmatprep.subr.bf16.mxu0 0
  %691 = vmatpush1.bf16.msra.mxu0 0
  %692 = vmatprep.subr.bf16.mxu0 0
  %693 = vmatpush1.bf16.msra.mxu0 0
  %694 = vmatprep.subr.bf16.mxu0 0
  %695 = vmatpush1.bf16.msra.mxu0 0
  %696 = vmatprep.subr.bf16.mxu0 0
  %697 = vmatpush1.bf16.msra.mxu0 0
  %698 = vmatprep.subr.bf16.mxu0 0
  %699 = vmatpush1.bf16.msra.mxu0 0
  %700 = vmatprep.subr.bf16.mxu0 0
  %701 = vmatpush1.bf16.msra.mxu0 %v170
  %702 = vmatprep.subr.bf16.mxu0 0
  %703 = vmatpush1.bf16.msra.mxu0 %v169
  %704 = vmatprep.subr.bf16.mxu0 0
  %705 = vmatpush2.bf16.msra.mxu0 0
  %706 = vmatprep.subr.bf16.mxu0 0
  %707 = vmatpush2.bf16.msra.mxu0 0
  %708 = vmatprep.subr.bf16.mxu0 0
  %709 = vmatpush2.bf16.msra.mxu0 0
  %710 = vmatprep.subr.bf16.mxu0 0
  %711 = vmatpush2.bf16.msra.mxu0 0
  %712 = vmatprep.subr.bf16.mxu0 0
  %713 = vmatpush2.bf16.msra.mxu0 0
  %714 = vmatprep.subr.bf16.mxu0 0
  %715 = vmatpush2.bf16.msra.mxu0 0
  %716 = vmatprep.subr.bf16.mxu0 0
  %717 = vmatpush2.bf16.msra.mxu0 0
  %718 = vmatprep.subr.bf16.mxu0 0
  %719 = vmatpush2.bf16.msra.mxu0 0
  %720 = vmatprep.mubr.bf16.mxu0 0
  %721 = vmatmul.mubr.bf16.gmra.mxu0 %v686
  %v722 = vpop.f32.mrf.mxu0
  %v723 = vadd.f32 0.0, %v722
  %v724 = vpop.f32.mrf.mxu0
  %v725 = vpop.f32.mrf.mxu0
  %v726 = vpop.f32.mrf.mxu0
  %727 = vdwg.mxu0
  %v728 = vadd.f32 %v681, %v723
  %v729 = vxor.u32 %v728, 2147483648
  %v730 = vmul.f32 %v729, 1.442695
  %v731 = vpow.pop %v730
  %v732 = vadd.f32 %v731, 1.0
  %v733 = vrcp.pop %v732
  %v734 = vmul.f32 1.0, %v733
  %v735 = vtanh.pop %v728
  %v736 = vmul.f32 %v734, %v673
  %738 = vrot.lane.b32.xlu0 %v735, 64
  %v739 = vpop.permute.xlu0 %738
  %v741 = vmul.f32 %v734, %v739
  %743 = vrot.lane.b32.xlu0 %v741, 32
  %v744 = vpop.permute.xlu0 %743
  %v746 = vadd.f32 %v736, %v744
  %v747 = vtanh.pop %v746
  %749 = vrot.lane.b32.xlu0 %v747, 64
  %v750 = vpop.permute.xlu0 %749
  %v752 = vmul.f32 %v734, %v750
  %v753 = vpack.c.bf16 %v752, %v752
  %v754 = vrot.slane %v315, 4
  %v755 = vrot.slane %v461, 4
  %v756 = vrot.slane %v607, 4
  %v758 = vrot.slane %v753, 4
  %vm759 = vcmask 1043456
  %v762 = vsel %vm759, %v242, %v754
  %v765 = vsel %vm759, %v388, %v755
  %v768 = vsel %vm759, %v534, %v756
  %v771 = vsel %vm759, %v680, %v758
  %v776 = vunpack.c.l.b16 %v762
  %v777 = vunpack.c.h.b16 %v762
  %v778 = vunpack.c.l.b16 %v765
  %v779 = vunpack.c.h.b16 %v765
  %v780 = vunpack.c.l.b16 %v768
  %v781 = vunpack.c.h.b16 %v768
  %v782 = vunpack.c.l.b16 %v771
  %v783 = vunpack.c.h.b16 %v771
  %v784 = vpack.c.b16 %v776, %v776
  %v785 = vpack.c.b16 %v777, %v777
  %v786 = vpack.c.b16 %v778, %v778
  %v787 = vpack.c.b16 %v779, %v779
  %v788 = vpack.c.b16 %v780, %v780
  %v789 = vpack.c.b16 %v781, %v781
  %v790 = vpack.c.b16 %v782, %v782
  %v791 = vpack.c.b16 %v783, %v783
  %792 = vrot.lane.b32.xlu0 %v784, 32
  %v793 = vpop.permute.xlu0 %792
  %794 = vrot.lane.b32.xlu0 %v785, 32
  %v795 = vpop.permute.xlu0 %794
  %796 = vrot.lane.b32.xlu0 %v786, 32
  %v797 = vpop.permute.xlu0 %796
  %798 = vrot.lane.b32.xlu0 %v787, 32
  %v799 = vpop.permute.xlu0 %798
  %800 = vrot.lane.b32.xlu0 %v788, 32
  %v801 = vpop.permute.xlu0 %800
  %802 = vrot.lane.b32.xlu0 %v789, 32
  %v803 = vpop.permute.xlu0 %802
  %804 = vrot.lane.b32.xlu0 %v790, 32
  %v805 = vpop.permute.xlu0 %804
  %806 = vrot.lane.b32.xlu0 %v791, 32
  %v807 = vpop.permute.xlu0 %806
  %vm816 = vcmask 257024
  %817 = vst.msk [vmem:[#allocation3] sm:$0xf] %vm816, %v793
  %818 = vst.msk [vmem:[#allocation3 + $0x4] sm:$0xf] %vm816, %v795
  %819 = vst.msk [vmem:[#allocation3 + $0x8] sm:$0xf] %vm816, %v797
  %820 = vst.msk [vmem:[#allocation3 + $0xc] sm:$0xf] %vm816, %v799
  %821 = vst.msk [vmem:[#allocation3 + $0x10] sm:$0xf] %vm816, %v801
  %822 = vst.msk [vmem:[#allocation3 + $0x14] sm:$0xf] %vm816, %v803
  %823 = vst.msk [vmem:[#allocation3 + $0x18] sm:$0xf] %vm816, %v805
  %824 = vst.msk [vmem:[#allocation3 + $0x1c] sm:$0xf] %vm816, %v807
  %v825 = vld [vmem:[#allocation3] sm:$0xf]
  %v826 = vld [vmem:[#allocation3 + $0x4] sm:$0xf]
  %v827 = vld [vmem:[#allocation3 + $0x8] sm:$0xf]
  %v828 = vld [vmem:[#allocation3 + $0xc] sm:$0xf]
  %v829 = vld [vmem:[#allocation3 + $0x10] sm:$0xf]
  %v830 = vld [vmem:[#allocation3 + $0x14] sm:$0xf]
  %v831 = vld [vmem:[#allocation3 + $0x18] sm:$0xf]
  %v832 = vld [vmem:[#allocation3 + $0x1c] sm:$0xf]
  %v833 = vld [vmem:[%s4] sm:$0xf]
  %v834 = vld [vmem:[%s4 + $0x4] sm:$0xf]
  %v835 = vld [vmem:[%s4 + $0x8] sm:$0xf]
  %v836 = vld [vmem:[%s4 + $0xc] sm:$0xf]
  %v837 = vld [vmem:[%s6] sm:$0x1]
  %v839 = vlaneseq
  %v840 = vshrl.u32 %v839, 7
  %v841 = vsub.s32 0, %v840
  %v842 = vrot.slane %v837, %v841
  %v852 = vunpack.c.l.b16 %v825
  %v853 = vunpack.c.l.b16 %v826
  %v854 = vunpack.c.l.b16 %v827
  %v855 = vunpack.c.l.b16 %v828
  %v856 = vunpack.c.l.b16 %v829
  %v857 = vunpack.c.l.b16 %v830
  %v858 = vunpack.c.l.b16 %v831
  %v859 = vunpack.c.l.b16 %v832
  %v860 = vpack.c.b16 %v853, %v852
  %v861 = vpack.c.b16 %v855, %v854
  %v862 = vpack.c.b16 %v857, %v856
  %v863 = vpack.c.b16 %v859, %v858
  %v868 = vunpack.c.l.b16 %v833
  %v869 = vunpack.c.l.b16 %v834
  %v870 = vunpack.c.l.b16 %v835
  %v871 = vunpack.c.l.b16 %v836
  %v872 = vpack.c.b16 %v869, %v868
  %v873 = vpack.c.b16 %v871, %v870
  %v877 = vsel %vm173, %v860, 0
  %v880 = vsel %vm173, %v861, 0
  %v883 = vsel %vm173, %v862, 0
  %v886 = vsel %vm173, %v863, 0
  %888 = vmatprep.subr.bf16.mxu0 0
  %889 = vmatpush1.bf16.msra.mxu0 0
  %890 = vmatprep.subr.bf16.mxu0 0
  %891 = vmatpush1.bf16.msra.mxu0 0
  %892 = vmatprep.subr.bf16.mxu0 0
  %893 = vmatpush1.bf16.msra.mxu0 0
  %894 = vmatprep.subr.bf16.mxu0 0
  %895 = vmatpush1.bf16.msra.mxu0 0
  %896 = vmatprep.subr.bf16.mxu0 0
  %897 = vmatpush1.bf16.msra.mxu0 0
  %898 = vmatprep.subr.bf16.mxu0 0
  %899 = vmatpush1.bf16.msra.mxu0 0
  %900 = vmatprep.subr.bf16.mxu0 0
  %901 = vmatpush1.bf16.msra.mxu0 %v873
  %902 = vmatprep.subr.bf16.mxu0 0
  %903 = vmatpush1.bf16.msra.mxu0 %v872
  %904 = vmatprep.subr.bf16.mxu0 0
  %905 = vmatpush2.bf16.msra.mxu0 0
  %906 = vmatprep.subr.bf16.mxu0 0
  %907 = vmatpush2.bf16.msra.mxu0 0
  %908 = vmatprep.subr.bf16.mxu0 0
  %909 = vmatpush2.bf16.msra.mxu0 0
  %910 = vmatprep.subr.bf16.mxu0 0
  %911 = vmatpush2.bf16.msra.mxu0 0
  %912 = vmatprep.subr.bf16.mxu0 0
  %913 = vmatpush2.bf16.msra.mxu0 0
  %914 = vmatprep.subr.bf16.mxu0 0
  %915 = vmatpush2.bf16.msra.mxu0 0
  %916 = vmatprep.subr.bf16.mxu0 0
  %917 = vmatpush2.bf16.msra.mxu0 0
  %918 = vmatprep.subr.bf16.mxu0 0
  %919 = vmatpush2.bf16.msra.mxu0 0
  %920 = vmatprep.mubr.bf16.mxu0 0
  %921 = vmatmul.mubr.bf16.gmra.mxu0 %v877
  %v922 = vpop.f32.mrf.mxu0
  %v923 = vadd.f32 %v842, %v922
  %v924 = vpop.f32.mrf.mxu0
  %v925 = vpop.f32.mrf.mxu0
  %v926 = vadd.f32 %v842, %v925
  %v927 = vpop.f32.mrf.mxu0
  %928 = vmatprep.mubr.bf16.mxu0 0
  %929 = vmatmul.mubr.bf16.gmra.mxu0 %v880
  %v930 = vpop.f32.mrf.mxu0
  %v931 = vadd.f32 %v842, %v930
  %v932 = vpop.f32.mrf.mxu0
  %v933 = vpop.f32.mrf.mxu0
  %v934 = vadd.f32 %v842, %v933
  %v935 = vpop.f32.mrf.mxu0
  %936 = vmatprep.mubr.bf16.mxu0 0
  %937 = vmatmul.mubr.bf16.gmra.mxu0 %v883
  %v938 = vpop.f32.mrf.mxu0
  %v939 = vadd.f32 %v842, %v938
  %v940 = vpop.f32.mrf.mxu0
  %v941 = vpop.f32.mrf.mxu0
  %v942 = vadd.f32 %v842, %v941
  %v943 = vpop.f32.mrf.mxu0
  %944 = vmatprep.mubr.bf16.mxu0 0
  %945 = vmatmul.mubr.bf16.gmra.mxu0 %v886
  %v946 = vpop.f32.mrf.mxu0
  %v947 = vadd.f32 %v842, %v946
  %v948 = vpop.f32.mrf.mxu0
  %v949 = vpop.f32.mrf.mxu0
  %v950 = vadd.f32 %v842, %v949
  %v951 = vpop.f32.mrf.mxu0
  %952 = vdwg.mxu0
  %953 = vst [vmem:[#allocation2] sm:$0xff] %v923
  %954 = vst [vmem:[#allocation2 + $0x8] sm:$0xff] %v926
  %955 = vst [vmem:[#allocation2 + $0x10] sm:$0xff] %v931
  %956 = vst [vmem:[#allocation2 + $0x18] sm:$0xff] %v934
  %957 = vst [vmem:[#allocation2 + $0x20] sm:$0xff] %v939
  %958 = vst [vmem:[#allocation2 + $0x28] sm:$0xff] %v942
  %959 = vst [vmem:[#allocation2 + $0x30] sm:$0xff] %v947
  %960 = vst [vmem:[#allocation2 + $0x38] sm:$0xff] %v950
  %v961 = vld [vmem:[%s5] sm:$0xf]
  %v962 = vld [vmem:[%s5 + $0x4] sm:$0xf]
  %v963 = vld [vmem:[%s5 + $0x8] sm:$0xf]
  %v964 = vld [vmem:[%s5 + $0xc] sm:$0xf]
  %v965 = vld [vmem:[#allocation2] sm:$0xff]
  %v970 = vunpack.c.l.b16 %v961
  %v971 = vunpack.c.l.b16 %v962
  %v972 = vunpack.c.l.b16 %v963
  %v973 = vunpack.c.l.b16 %v964
  %v974 = vpack.c.b16 %v971, %v970
  %v975 = vpack.c.b16 %v973, %v972
  %978 = vmatprep.subr.bf16.mxu0 0
  %979 = vmatpush1.bf16.msra.mxu0 0
  %980 = vmatprep.subr.bf16.mxu0 0
  %981 = vmatpush1.bf16.msra.mxu0 0
  %982 = vmatprep.subr.bf16.mxu0 0
  %983 = vmatpush1.bf16.msra.mxu0 0
  %984 = vmatprep.subr.bf16.mxu0 0
  %985 = vmatpush1.bf16.msra.mxu0 0
  %986 = vmatprep.subr.bf16.mxu0 0
  %987 = vmatpush1.bf16.msra.mxu0 0
  %988 = vmatprep.subr.bf16.mxu0 0
  %989 = vmatpush1.bf16.msra.mxu0 0
  %990 = vmatprep.subr.bf16.mxu0 0
  %991 = vmatpush1.bf16.msra.mxu0 %v975
  %992 = vmatprep.subr.bf16.mxu0 0
  %993 = vmatpush1.bf16.msra.mxu0 %v974
  %994 = vmatprep.subr.bf16.mxu0 0
  %995 = vmatpush2.bf16.msra.mxu0 0
  %996 = vmatprep.subr.bf16.mxu0 0
  %997 = vmatpush2.bf16.msra.mxu0 0
  %998 = vmatprep.subr.bf16.mxu0 0
  %999 = vmatpush2.bf16.msra.mxu0 0
  %1000 = vmatprep.subr.bf16.mxu0 0
  %1001 = vmatpush2.bf16.msra.mxu0 0
  %1002 = vmatprep.subr.bf16.mxu0 0
  %1003 = vmatpush2.bf16.msra.mxu0 0
  %1004 = vmatprep.subr.bf16.mxu0 0
  %1005 = vmatpush2.bf16.msra.mxu0 0
  %1006 = vmatprep.subr.bf16.mxu0 0
  %1007 = vmatpush2.bf16.msra.mxu0 0
  %1008 = vmatprep.subr.bf16.mxu0 0
  %1009 = vmatpush2.bf16.msra.mxu0 0
  %1010 = vmatprep.mubr.bf16.mxu0 0
  %1011 = vmatmul.mubr.bf16.gmra.mxu0 %v175
  %v1012 = vpop.f32.mrf.mxu0
  %v1013 = vadd.f32 0.0, %v1012
  %v1014 = vpop.f32.mrf.mxu0
  %v1015 = vpop.f32.mrf.mxu0
  %v1016 = vpop.f32.mrf.mxu0
  %1017 = vdwg.mxu0
  %v1018 = vadd.f32 %v965, %v1013
  %v1019 = vxor.u32 %v1018, 2147483648
  %v1020 = vmul.f32 %v1019, 1.442695
  %v1021 = vpow.pop %v1020
  %v1022 = vadd.f32 %v1021, 1.0
  %v1023 = vrcp.pop %v1022
  %v1024 = vmul.f32 1.0, %v1023
  %v1025 = vtanh.pop %v1018
  %v1026 = vmul.f32 %v1024, 0.0
  %1028 = vrot.lane.b32.xlu0 %v1025, 64
  %v1029 = vpop.permute.xlu0 %1028
  %v1031 = vmul.f32 %v1024, %v1029
  %1033 = vrot.lane.b32.xlu0 %v1031, 32
  %v1034 = vpop.permute.xlu0 %1033
  %v1036 = vadd.f32 %v1026, %v1034
  %v1037 = vtanh.pop %v1036
  %1039 = vrot.lane.b32.xlu0 %v1037, 64
  %v1040 = vpop.permute.xlu0 %1039
  %v1042 = vmul.f32 %v1024, %v1040
  %v1043 = vld [vmem:[#allocation2 + $0x8] sm:$0xff]
  %v1044 = vpack.c.bf16 %v1042, %v1042
  %1046 = vrot.lane.b32.xlu0 %v1044, 32
  %v1047 = vpop.permute.xlu0 %1046
  %v1049 = vsel %vm173, %v1047, 0
  %1051 = vmatprep.subr.bf16.mxu0 0
  %1052 = vmatpush1.bf16.msra.mxu0 0
  %1053 = vmatprep.subr.bf16.mxu0 0
  %1054 = vmatpush1.bf16.msra.mxu0 0
  %1055 = vmatprep.subr.bf16.mxu0 0
  %1056 = vmatpush1.bf16.msra.mxu0 0
  %1057 = vmatprep.subr.bf16.mxu0 0
  %1058 = vmatpush1.bf16.msra.mxu0 0
  %1059 = vmatprep.subr.bf16.mxu0 0
  %1060 = vmatpush1.bf16.msra.mxu0 0
  %1061 = vmatprep.subr.bf16.mxu0 0
  %1062 = vmatpush1.bf16.msra.mxu0 0
  %1063 = vmatprep.subr.bf16.mxu0 0
  %1064 = vmatpush1.bf16.msra.mxu0 %v975
  %1065 = vmatprep.subr.bf16.mxu0 0
  %1066 = vmatpush1.bf16.msra.mxu0 %v974
  %1067 = vmatprep.subr.bf16.mxu0 0
  %1068 = vmatpush2.bf16.msra.mxu0 0
  %1069 = vmatprep.subr.bf16.mxu0 0
  %1070 = vmatpush2.bf16.msra.mxu0 0
  %1071 = vmatprep.subr.bf16.mxu0 0
  %1072 = vmatpush2.bf16.msra.mxu0 0
  %1073 = vmatprep.subr.bf16.mxu0 0
  %1074 = vmatpush2.bf16.msra.mxu0 0
  %1075 = vmatprep.subr.bf16.mxu0 0
  %1076 = vmatpush2.bf16.msra.mxu0 0
  %1077 = vmatprep.subr.bf16.mxu0 0
  %1078 = vmatpush2.bf16.msra.mxu0 0
  %1079 = vmatprep.subr.bf16.mxu0 0
  %1080 = vmatpush2.bf16.msra.mxu0 0
  %1081 = vmatprep.subr.bf16.mxu0 0
  %1082 = vmatpush2.bf16.msra.mxu0 0
  %1083 = vmatprep.mubr.bf16.mxu0 0
  %1084 = vmatmul.mubr.bf16.gmra.mxu0 %v1049
  %v1085 = vpop.f32.mrf.mxu0
  %v1086 = vadd.f32 0.0, %v1085
  %v1087 = vpop.f32.mrf.mxu0
  %v1088 = vpop.f32.mrf.mxu0
  %v1089 = vpop.f32.mrf.mxu0
  %1090 = vdwg.mxu0
  %v1091 = vadd.f32 %v1043, %v1086
  %v1092 = vxor.u32 %v1091, 2147483648
  %v1093 = vmul.f32 %v1092, 1.442695
  %v1094 = vpow.pop %v1093
  %v1095 = vadd.f32 %v1094, 1.0
  %v1096 = vrcp.pop %v1095
  %v1097 = vmul.f32 1.0, %v1096
  %v1098 = vtanh.pop %v1091
  %v1099 = vmul.f32 %v1097, %v1036
  %1101 = vrot.lane.b32.xlu0 %v1098, 64
  %v1102 = vpop.permute.xlu0 %1101
  %v1104 = vmul.f32 %v1097, %v1102
  %1106 = vrot.lane.b32.xlu0 %v1104, 32
  %v1107 = vpop.permute.xlu0 %1106
  %v1109 = vadd.f32 %v1099, %v1107
  %v1110 = vtanh.pop %v1109
  %1112 = vrot.lane.b32.xlu0 %v1110, 64
  %v1113 = vpop.permute.xlu0 %1112
  %v1115 = vmul.f32 %v1097, %v1113
  %v1116 = vld [vmem:[#allocation2 + $0x10] sm:$0xff]
  %v1117 = vpack.c.bf16 %v1115, %v1115
  %1119 = vrot.lane.b32.xlu0 %v1117, 32
  %v1120 = vpop.permute.xlu0 %1119
  %v1122 = vsel %vm173, %v1120, 0
  %1124 = vmatprep.subr.bf16.mxu0 0
  %1125 = vmatpush1.bf16.msra.mxu0 0
  %1126 = vmatprep.subr.bf16.mxu0 0
  %1127 = vmatpush1.bf16.msra.mxu0 0
  %1128 = vmatprep.subr.bf16.mxu0 0
  %1129 = vmatpush1.bf16.msra.mxu0 0
  %1130 = vmatprep.subr.bf16.mxu0 0
  %1131 = vmatpush1.bf16.msra.mxu0 0
  %1132 = vmatprep.subr.bf16.mxu0 0
  %1133 = vmatpush1.bf16.msra.mxu0 0
  %1134 = vmatprep.subr.bf16.mxu0 0
  %1135 = vmatpush1.bf16.msra.mxu0 0
  %1136 = vmatprep.subr.bf16.mxu0 0
  %1137 = vmatpush1.bf16.msra.mxu0 %v975
  %1138 = vmatprep.subr.bf16.mxu0 0
  %1139 = vmatpush1.bf16.msra.mxu0 %v974
  %1140 = vmatprep.subr.bf16.mxu0 0
  %1141 = vmatpush2.bf16.msra.mxu0 0
  %1142 = vmatprep.subr.bf16.mxu0 0
  %1143 = vmatpush2.bf16.msra.mxu0 0
  %1144 = vmatprep.subr.bf16.mxu0 0
  %1145 = vmatpush2.bf16.msra.mxu0 0
  %1146 = vmatprep.subr.bf16.mxu0 0
  %1147 = vmatpush2.bf16.msra.mxu0 0
  %1148 = vmatprep.subr.bf16.mxu0 0
  %1149 = vmatpush2.bf16.msra.mxu0 0
  %1150 = vmatprep.subr.bf16.mxu0 0
  %1151 = vmatpush2.bf16.msra.mxu0 0
  %1152 = vmatprep.subr.bf16.mxu0 0
  %1153 = vmatpush2.bf16.msra.mxu0 0
  %1154 = vmatprep.subr.bf16.mxu0 0
  %1155 = vmatpush2.bf16.msra.mxu0 0
  %1156 = vmatprep.mubr.bf16.mxu0 0
  %1157 = vmatmul.mubr.bf16.gmra.mxu0 %v1122
  %v1158 = vpop.f32.mrf.mxu0
  %v1159 = vadd.f32 0.0, %v1158
  %v1160 = vpop.f32.mrf.mxu0
  %v1161 = vpop.f32.mrf.mxu0
  %v1162 = vpop.f32.mrf.mxu0
  %1163 = vdwg.mxu0
  %v1164 = vadd.f32 %v1116, %v1159
  %v1165 = vxor.u32 %v1164, 2147483648
  %v1166 = vmul.f32 %v1165, 1.442695
  %v1167 = vpow.pop %v1166
  %v1168 = vadd.f32 %v1167, 1.0
  %v1169 = vrcp.pop %v1168
  %v1170 = vmul.f32 1.0, %v1169
  %v1171 = vtanh.pop %v1164
  %v1172 = vmul.f32 %v1170, %v1109
  %1174 = vrot.lane.b32.xlu0 %v1171, 64
  %v1175 = vpop.permute.xlu0 %1174
  %v1177 = vmul.f32 %v1170, %v1175
  %1179 = vrot.lane.b32.xlu0 %v1177, 32
  %v1180 = vpop.permute.xlu0 %1179
  %v1182 = vadd.f32 %v1172, %v1180
  %v1183 = vtanh.pop %v1182
  %1185 = vrot.lane.b32.xlu0 %v1183, 64
  %v1186 = vpop.permute.xlu0 %1185
  %v1188 = vmul.f32 %v1170, %v1186
  %v1189 = vld [vmem:[#allocation2 + $0x18] sm:$0xff]
  %v1190 = vpack.c.bf16 %v1188, %v1188
  %1192 = vrot.lane.b32.xlu0 %v1190, 32
  %v1193 = vpop.permute.xlu0 %1192
  %v1195 = vsel %vm173, %v1193, 0
  %1197 = vmatprep.subr.bf16.mxu0 0
  %1198 = vmatpush1.bf16.msra.mxu0 0
  %1199 = vmatprep.subr.bf16.mxu0 0
  %1200 = vmatpush1.bf16.msra.mxu0 0
  %1201 = vmatprep.subr.bf16.mxu0 0
  %1202 = vmatpush1.bf16.msra.mxu0 0
  %1203 = vmatprep.subr.bf16.mxu0 0
  %1204 = vmatpush1.bf16.msra.mxu0 0
  %1205 = vmatprep.subr.bf16.mxu0 0
  %1206 = vmatpush1.bf16.msra.mxu0 0
  %1207 = vmatprep.subr.bf16.mxu0 0
  %1208 = vmatpush1.bf16.msra.mxu0 0
  %1209 = vmatprep.subr.bf16.mxu0 0
  %1210 = vmatpush1.bf16.msra.mxu0 %v975
  %1211 = vmatprep.subr.bf16.mxu0 0
  %1212 = vmatpush1.bf16.msra.mxu0 %v974
  %1213 = vmatprep.subr.bf16.mxu0 0
  %1214 = vmatpush2.bf16.msra.mxu0 0
  %1215 = vmatprep.subr.bf16.mxu0 0
  %1216 = vmatpush2.bf16.msra.mxu0 0
  %1217 = vmatprep.subr.bf16.mxu0 0
  %1218 = vmatpush2.bf16.msra.mxu0 0
  %1219 = vmatprep.subr.bf16.mxu0 0
  %1220 = vmatpush2.bf16.msra.mxu0 0
  %1221 = vmatprep.subr.bf16.mxu0 0
  %1222 = vmatpush2.bf16.msra.mxu0 0
  %1223 = vmatprep.subr.bf16.mxu0 0
  %1224 = vmatpush2.bf16.msra.mxu0 0
  %1225 = vmatprep.subr.bf16.mxu0 0
  %1226 = vmatpush2.bf16.msra.mxu0 0
  %1227 = vmatprep.subr.bf16.mxu0 0
  %1228 = vmatpush2.bf16.msra.mxu0 0
  %1229 = vmatprep.mubr.bf16.mxu0 0
  %1230 = vmatmul.mubr.bf16.gmra.mxu0 %v1195
  %v1231 = vpop.f32.mrf.mxu0
  %v1232 = vadd.f32 0.0, %v1231
  %v1233 = vpop.f32.mrf.mxu0
  %v1234 = vpop.f32.mrf.mxu0
  %v1235 = vpop.f32.mrf.mxu0
  %1236 = vdwg.mxu0
  %v1237 = vadd.f32 %v1189, %v1232
  %v1238 = vxor.u32 %v1237, 2147483648
  %v1239 = vmul.f32 %v1238, 1.442695
  %v1240 = vpow.pop %v1239
  %v1241 = vadd.f32 %v1240, 1.0
  %v1242 = vrcp.pop %v1241
  %v1243 = vmul.f32 1.0, %v1242
  %v1244 = vtanh.pop %v1237
  %v1245 = vmul.f32 %v1243, %v1182
  %1247 = vrot.lane.b32.xlu0 %v1244, 64
  %v1248 = vpop.permute.xlu0 %1247
  %v1250 = vmul.f32 %v1243, %v1248
  %1252 = vrot.lane.b32.xlu0 %v1250, 32
  %v1253 = vpop.permute.xlu0 %1252
  %v1255 = vadd.f32 %v1245, %v1253
  %v1256 = vtanh.pop %v1255
  %1258 = vrot.lane.b32.xlu0 %v1256, 64
  %v1259 = vpop.permute.xlu0 %1258
  %v1261 = vmul.f32 %v1243, %v1259
  %v1262 = vld [vmem:[#allocation2 + $0x20] sm:$0xff]
  %v1263 = vpack.c.bf16 %v1261, %v1261
  %1265 = vrot.lane.b32.xlu0 %v1263, 32
  %v1266 = vpop.permute.xlu0 %1265
  %v1268 = vsel %vm173, %v1266, 0
  %1270 = vmatprep.subr.bf16.mxu0 0
  %1271 = vmatpush1.bf16.msra.mxu0 0
  %1272 = vmatprep.subr.bf16.mxu0 0
  %1273 = vmatpush1.bf16.msra.mxu0 0
  %1274 = vmatprep.subr.bf16.mxu0 0
  %1275 = vmatpush1.bf16.msra.mxu0 0
  %1276 = vmatprep.subr.bf16.mxu0 0
  %1277 = vmatpush1.bf16.msra.mxu0 0
  %1278 = vmatprep.subr.bf16.mxu0 0
  %1279 = vmatpush1.bf16.msra.mxu0 0
  %1280 = vmatprep.subr.bf16.mxu0 0
  %1281 = vmatpush1.bf16.msra.mxu0 0
  %1282 = vmatprep.subr.bf16.mxu0 0
  %1283 = vmatpush1.bf16.msra.mxu0 %v975
  %1284 = vmatprep.subr.bf16.mxu0 0
  %1285 = vmatpush1.bf16.msra.mxu0 %v974
  %1286 = vmatprep.subr.bf16.mxu0 0
  %1287 = vmatpush2.bf16.msra.mxu0 0
  %1288 = vmatprep.subr.bf16.mxu0 0
  %1289 = vmatpush2.bf16.msra.mxu0 0
  %1290 = vmatprep.subr.bf16.mxu0 0
  %1291 = vmatpush2.bf16.msra.mxu0 0
  %1292 = vmatprep.subr.bf16.mxu0 0
  %1293 = vmatpush2.bf16.msra.mxu0 0
  %1294 = vmatprep.subr.bf16.mxu0 0
  %1295 = vmatpush2.bf16.msra.mxu0 0
  %1296 = vmatprep.subr.bf16.mxu0 0
  %1297 = vmatpush2.bf16.msra.mxu0 0
  %1298 = vmatprep.subr.bf16.mxu0 0
  %1299 = vmatpush2.bf16.msra.mxu0 0
  %1300 = vmatprep.subr.bf16.mxu0 0
  %1301 = vmatpush2.bf16.msra.mxu0 0
  %1302 = vmatprep.mubr.bf16.mxu0 0
  %1303 = vmatmul.mubr.bf16.gmra.mxu0 %v1268
  %v1304 = vpop.f32.mrf.mxu0
  %v1305 = vadd.f32 0.0, %v1304
  %v1306 = vpop.f32.mrf.mxu0
  %v1307 = vpop.f32.mrf.mxu0
  %v1308 = vpop.f32.mrf.mxu0
  %1309 = vdwg.mxu0
  %v1310 = vadd.f32 %v1262, %v1305
  %v1311 = vxor.u32 %v1310, 2147483648
  %v1312 = vmul.f32 %v1311, 1.442695
  %v1313 = vpow.pop %v1312
  %v1314 = vadd.f32 %v1313, 1.0
  %v1315 = vrcp.pop %v1314
  %v1316 = vmul.f32 1.0, %v1315
  %v1317 = vtanh.pop %v1310
  %v1318 = vmul.f32 %v1316, %v1255
  %1320 = vrot.lane.b32.xlu0 %v1317, 64
  %v1321 = vpop.permute.xlu0 %1320
  %v1323 = vmul.f32 %v1316, %v1321
  %1325 = vrot.lane.b32.xlu0 %v1323, 32
  %v1326 = vpop.permute.xlu0 %1325
  %v1328 = vadd.f32 %v1318, %v1326
  %v1329 = vtanh.pop %v1328
  %1331 = vrot.lane.b32.xlu0 %v1329, 64
  %v1332 = vpop.permute.xlu0 %1331
  %v1334 = vmul.f32 %v1316, %v1332
  %v1335 = vld [vmem:[#allocation2 + $0x28] sm:$0xff]
  %v1336 = vpack.c.bf16 %v1334, %v1334
  %1338 = vrot.lane.b32.xlu0 %v1336, 32
  %v1339 = vpop.permute.xlu0 %1338
  %v1341 = vsel %vm173, %v1339, 0
  %1343 = vmatprep.subr.bf16.mxu0 0
  %1344 = vmatpush1.bf16.msra.mxu0 0
  %1345 = vmatprep.subr.bf16.mxu0 0
  %1346 = vmatpush1.bf16.msra.mxu0 0
  %1347 = vmatprep.subr.bf16.mxu0 0
  %1348 = vmatpush1.bf16.msra.mxu0 0
  %1349 = vmatprep.subr.bf16.mxu0 0
  %1350 = vmatpush1.bf16.msra.mxu0 0
  %1351 = vmatprep.subr.bf16.mxu0 0
  %1352 = vmatpush1.bf16.msra.mxu0 0
  %1353 = vmatprep.subr.bf16.mxu0 0
  %1354 = vmatpush1.bf16.msra.mxu0 0
  %1355 = vmatprep.subr.bf16.mxu0 0
  %1356 = vmatpush1.bf16.msra.mxu0 %v975
  %1357 = vmatprep.subr.bf16.mxu0 0
  %1358 = vmatpush1.bf16.msra.mxu0 %v974
  %1359 = vmatprep.subr.bf16.mxu0 0
  %1360 = vmatpush2.bf16.msra.mxu0 0
  %1361 = vmatprep.subr.bf16.mxu0 0
  %1362 = vmatpush2.bf16.msra.mxu0 0
  %1363 = vmatprep.subr.bf16.mxu0 0
  %1364 = vmatpush2.bf16.msra.mxu0 0
  %1365 = vmatprep.subr.bf16.mxu0 0
  %1366 = vmatpush2.bf16.msra.mxu0 0
  %1367 = vmatprep.subr.bf16.mxu0 0
  %1368 = vmatpush2.bf16.msra.mxu0 0
  %1369 = vmatprep.subr.bf16.mxu0 0
  %1370 = vmatpush2.bf16.msra.mxu0 0
  %1371 = vmatprep.subr.bf16.mxu0 0
  %1372 = vmatpush2.bf16.msra.mxu0 0
  %1373 = vmatprep.subr.bf16.mxu0 0
  %1374 = vmatpush2.bf16.msra.mxu0 0
  %1375 = vmatprep.mubr.bf16.mxu0 0
  %1376 = vmatmul.mubr.bf16.gmra.mxu0 %v1341
  %v1377 = vpop.f32.mrf.mxu0
  %v1378 = vadd.f32 0.0, %v1377
  %v1379 = vpop.f32.mrf.mxu0
  %v1380 = vpop.f32.mrf.mxu0
  %v1381 = vpop.f32.mrf.mxu0
  %1382 = vdwg.mxu0
  %v1383 = vadd.f32 %v1335, %v1378
  %v1384 = vxor.u32 %v1383, 2147483648
  %v1385 = vmul.f32 %v1384, 1.442695
  %v1386 = vpow.pop %v1385
  %v1387 = vadd.f32 %v1386, 1.0
  %v1388 = vrcp.pop %v1387
  %v1389 = vmul.f32 1.0, %v1388
  %v1390 = vtanh.pop %v1383
  %v1391 = vmul.f32 %v1389, %v1328
  %1393 = vrot.lane.b32.xlu0 %v1390, 64
  %v1394 = vpop.permute.xlu0 %1393
  %v1396 = vmul.f32 %v1389, %v1394
  %1398 = vrot.lane.b32.xlu0 %v1396, 32
  %v1399 = vpop.permute.xlu0 %1398
  %v1401 = vadd.f32 %v1391, %v1399
  %v1402 = vtanh.pop %v1401
  %1404 = vrot.lane.b32.xlu0 %v1402, 64
  %v1405 = vpop.permute.xlu0 %1404
  %v1407 = vmul.f32 %v1389, %v1405
  %v1408 = vld [vmem:[#allocation2 + $0x30] sm:$0xff]
  %v1409 = vpack.c.bf16 %v1407, %v1407
  %1411 = vrot.lane.b32.xlu0 %v1409, 32
  %v1412 = vpop.permute.xlu0 %1411
  %v1414 = vsel %vm173, %v1412, 0
  %1416 = vmatprep.subr.bf16.mxu0 0
  %1417 = vmatpush1.bf16.msra.mxu0 0
  %1418 = vmatprep.subr.bf16.mxu0 0
  %1419 = vmatpush1.bf16.msra.mxu0 0
  %1420 = vmatprep.subr.bf16.mxu0 0
  %1421 = vmatpush1.bf16.msra.mxu0 0
  %1422 = vmatprep.subr.bf16.mxu0 0
  %1423 = vmatpush1.bf16.msra.mxu0 0
  %1424 = vmatprep.subr.bf16.mxu0 0
  %1425 = vmatpush1.bf16.msra.mxu0 0
  %1426 = vmatprep.subr.bf16.mxu0 0
  %1427 = vmatpush1.bf16.msra.mxu0 0
  %1428 = vmatprep.subr.bf16.mxu0 0
  %1429 = vmatpush1.bf16.msra.mxu0 %v975
  %1430 = vmatprep.subr.bf16.mxu0 0
  %1431 = vmatpush1.bf16.msra.mxu0 %v974
  %1432 = vmatprep.subr.bf16.mxu0 0
  %1433 = vmatpush2.bf16.msra.mxu0 0
  %1434 = vmatprep.subr.bf16.mxu0 0
  %1435 = vmatpush2.bf16.msra.mxu0 0
  %1436 = vmatprep.subr.bf16.mxu0 0
  %1437 = vmatpush2.bf16.msra.mxu0 0
  %1438 = vmatprep.subr.bf16.mxu0 0
  %1439 = vmatpush2.bf16.msra.mxu0 0
  %1440 = vmatprep.subr.bf16.mxu0 0
  %1441 = vmatpush2.bf16.msra.mxu0 0
  %1442 = vmatprep.subr.bf16.mxu0 0
  %1443 = vmatpush2.bf16.msra.mxu0 0
  %1444 = vmatprep.subr.bf16.mxu0 0
  %1445 = vmatpush2.bf16.msra.mxu0 0
  %1446 = vmatprep.subr.bf16.mxu0 0
  %1447 = vmatpush2.bf16.msra.mxu0 0
  %1448 = vmatprep.mubr.bf16.mxu0 0
  %1449 = vmatmul.mubr.bf16.gmra.mxu0 %v1414
  %v1450 = vpop.f32.mrf.mxu0
  %v1451 = vadd.f32 0.0, %v1450
  %v1452 = vpop.f32.mrf.mxu0
  %v1453 = vpop.f32.mrf.mxu0
  %v1454 = vpop.f32.mrf.mxu0
  %1455 = vdwg.mxu0
  %v1456 = vadd.f32 %v1408, %v1451
  %v1457 = vxor.u32 %v1456, 2147483648
  %v1458 = vmul.f32 %v1457, 1.442695
  %v1459 = vpow.pop %v1458
  %v1460 = vadd.f32 %v1459, 1.0
  %v1461 = vrcp.pop %v1460
  %v1462 = vmul.f32 1.0, %v1461
  %v1463 = vtanh.pop %v1456
  %v1464 = vmul.f32 %v1462, %v1401
  %1466 = vrot.lane.b32.xlu0 %v1463, 64
  %v1467 = vpop.permute.xlu0 %1466
  %v1469 = vmul.f32 %v1462, %v1467
  %1471 = vrot.lane.b32.xlu0 %v1469, 32
  %v1472 = vpop.permute.xlu0 %1471
  %v1474 = vadd.f32 %v1464, %v1472
  %v1475 = vtanh.pop %v1474
  %1477 = vrot.lane.b32.xlu0 %v1475, 64
  %v1478 = vpop.permute.xlu0 %1477
  %v1480 = vmul.f32 %v1462, %v1478
  %v1481 = vld [vmem:[#allocation2 + $0x38] sm:$0xff]
  %v1482 = vpack.c.bf16 %v1480, %v1480
  %1484 = vrot.lane.b32.xlu0 %v1482, 32
  %v1485 = vpop.permute.xlu0 %1484
  %v1487 = vsel %vm173, %v1485, 0
  %1489 = vmatprep.subr.bf16.mxu0 0
  %1490 = vmatpush1.bf16.msra.mxu0 0
  %1491 = vmatprep.subr.bf16.mxu0 0
  %1492 = vmatpush1.bf16.msra.mxu0 0
  %1493 = vmatprep.subr.bf16.mxu0 0
  %1494 = vmatpush1.bf16.msra.mxu0 0
  %1495 = vmatprep.subr.bf16.mxu0 0
  %1496 = vmatpush1.bf16.msra.mxu0 0
  %1497 = vmatprep.subr.bf16.mxu0 0
  %1498 = vmatpush1.bf16.msra.mxu0 0
  %1499 = vmatprep.subr.bf16.mxu0 0
  %1500 = vmatpush1.bf16.msra.mxu0 0
  %1501 = vmatprep.subr.bf16.mxu0 0
  %1502 = vmatpush1.bf16.msra.mxu0 %v975
  %1503 = vmatprep.subr.bf16.mxu0 0
  %1504 = vmatpush1.bf16.msra.mxu0 %v974
  %1505 = vmatprep.subr.bf16.mxu0 0
  %1506 = vmatpush2.bf16.msra.mxu0 0
  %1507 = vmatprep.subr.bf16.mxu0 0
  %1508 = vmatpush2.bf16.msra.mxu0 0
  %1509 = vmatprep.subr.bf16.mxu0 0
  %1510 = vmatpush2.bf16.msra.mxu0 0
  %1511 = vmatprep.subr.bf16.mxu0 0
  %1512 = vmatpush2.bf16.msra.mxu0 0
  %1513 = vmatprep.subr.bf16.mxu0 0
  %1514 = vmatpush2.bf16.msra.mxu0 0
  %1515 = vmatprep.subr.bf16.mxu0 0
  %1516 = vmatpush2.bf16.msra.mxu0 0
  %1517 = vmatprep.subr.bf16.mxu0 0
  %1518 = vmatpush2.bf16.msra.mxu0 0
  %1519 = vmatprep.subr.bf16.mxu0 0
  %1520 = vmatpush2.bf16.msra.mxu0 0
  %1521 = vmatprep.mubr.bf16.mxu0 0
  %1522 = vmatmul.mubr.bf16.gmra.mxu0 %v1487
  %v1523 = vpop.f32.mrf.mxu0
  %v1524 = vadd.f32 0.0, %v1523
  %v1525 = vpop.f32.mrf.mxu0
  %v1526 = vpop.f32.mrf.mxu0
  %v1527 = vpop.f32.mrf.mxu0
  %1528 = vdwg.mxu0
  %v1529 = vadd.f32 %v1481, %v1524
  %v1530 = vxor.u32 %v1529, 2147483648
  %v1531 = vmul.f32 %v1530, 1.442695
  %v1532 = vpow.pop %v1531
  %v1533 = vadd.f32 %v1532, 1.0
  %v1534 = vrcp.pop %v1533
  %v1535 = vmul.f32 1.0, %v1534
  %v1536 = vtanh.pop %v1529
  %v1537 = vmul.f32 %v1535, %v1474
  %1539 = vrot.lane.b32.xlu0 %v1536, 64
  %v1540 = vpop.permute.xlu0 %1539
  %v1542 = vmul.f32 %v1535, %v1540
  %1544 = vrot.lane.b32.xlu0 %v1542, 32
  %v1545 = vpop.permute.xlu0 %1544
  %v1547 = vadd.f32 %v1537, %v1545
  %v1548 = vtanh.pop %v1547
  %1550 = vrot.lane.b32.xlu0 %v1548, 64
  %v1551 = vpop.permute.xlu0 %1550
  %v1553 = vmul.f32 %v1535, %v1551
  %1555 = vrot.lane.b32.xlu0 %v1553, 32
  %v1556 = vpop.permute.xlu0 %1555
  %1558 = vst.msk [vmem:[%s7] sm:$0xff] %vm173, %v1556
  // Predicated region
  $region30: #{lstm_model_forward.1} parent=0 // pred_check
    _
  $region31: #{lstm_model_forward.1} parent=0 // pred_check_branch
    %1560 = sbr.rel (0) target = $region33
  $region32: #{lstm_model_forward.1} parent=0 // pred_region
    _
  $region33: #{lstm_model_forward.1} parent=0 // pred_fallthru
    _
  // Predicated region
  $region34: #{lstm_model_forward.1} parent=0 // pred_check
    _
  $region35: #{lstm_model_forward.1} parent=0 // pred_check_branch
    %1562 = sbr.rel (0) target = $region37
  $region36: #{lstm_model_forward.1} parent=0 // pred_region
    _
  $region37: #{lstm_model_forward.1} parent=0 // pred_fallthru
    _

</llo_original>
